<compile_context>
chip_gen: v7x
topology: tpu7x:2x2x1
jax: 0.10.0
libtpu: 0.0.40
codegen_flags: <defaults>
</compile_context>

<pallas_src>
import functools
import math

import jax
import jax.numpy as jnp
from jax.experimental import pallas as pl
from jax.experimental.pallas import tpu as pltpu

# ---------------- small synthetic config ----------------
TD_HIDDEN = 128          # decoder hidden size
TD_FF = 256              # SwiGLU intermediate size
NUM_HEADS = 4
HEAD_DIM = TD_HIDDEN // NUM_HEADS
VOCAB = 256
RMS_EPS = 1e-6
NEG_INF = -1e30
DTYPE = jnp.float32


# =============================================================
# Fused decoder-layer + lm_head Pallas kernel (one per batch element)
# =============================================================
def _decoder_kernel(emb_ref, bias_ref,
                    ln1_ref, qkv_w_ref, qkv_b_ref, o_w_ref, o_b_ref,
                    ln2_ref, gu_w_ref, gu_b_ref, dn_w_ref, dn_b_ref,
                    lnf_ref, hd_w_ref, hd_b_ref,
                    logits_ref, *, num_heads, eps, scale):
    S = emb_ref.shape[1]
    D = emb_ref.shape[2]
    Dh = D // num_heads
    FF = dn_w_ref.shape[0]

    def rms(x, w_ref):
        var = jnp.mean(x * x, axis=-1, keepdims=True)
        return x * jax.lax.rsqrt(var + eps) * w_ref[...].astype(jnp.float32)

    def matmul(x, w_ref, b_ref):
        # bf16 MXU inputs, f32 accumulation.
        y = jnp.dot(x.astype(jnp.bfloat16), w_ref[...].astype(jnp.bfloat16),
                    preferred_element_type=jnp.float32)
        return y + b_ref[...].astype(jnp.float32)

    h = emb_ref[0].astype(jnp.float32)            # (S, D)
    key_bias = bias_ref[0].astype(jnp.float32)    # (1, S) additive key mask

    # ---- causal self-attention (fused QKV, all heads in-kernel) ----
    hn = rms(h, ln1_ref)
    qkv = matmul(hn, qkv_w_ref, qkv_b_ref)        # (S, 3D)
    iq = jax.lax.broadcasted_iota(jnp.int32, (S, S), 0)
    ik = jax.lax.broadcasted_iota(jnp.int32, (S, S), 1)
    causal = jnp.where(ik <= iq, 0.0, NEG_INF).astype(jnp.float32)
    heads = []
    for hh in range(num_heads):                   # static unroll
        qh = qkv[:, hh * Dh:(hh + 1) * Dh]
        kh = qkv[:, D + hh * Dh:D + (hh + 1) * Dh]
        vh = qkv[:, 2 * D + hh * Dh:2 * D + (hh + 1) * Dh]
        s = jax.lax.dot_general(qh.astype(jnp.bfloat16), kh.astype(jnp.bfloat16),
                                (((1,), (1,)), ((), ())),
                                preferred_element_type=jnp.float32) * scale
        s = s + causal + key_bias
        m = jnp.max(s, axis=-1, keepdims=True)
        p = jnp.exp(s - m)
        p = p * pl.reciprocal(jnp.sum(p, axis=-1, keepdims=True), approx=True)
        heads.append(jnp.dot(p.astype(jnp.bfloat16), vh.astype(jnp.bfloat16),
                             preferred_element_type=jnp.float32))
    attn = jnp.concatenate(heads, axis=-1)        # (S, D) lane-dense
    h = h + matmul(attn, o_w_ref, o_b_ref)

    # ---- SwiGLU MLP (fused gate + up) ----
    hn = rms(h, ln2_ref)
    gu = matmul(hn, gu_w_ref, gu_b_ref)           # (S, 2*FF)
    g = gu[:, :FF]
    u = gu[:, FF:]
    h = h + matmul(g * jax.nn.sigmoid(g) * u, dn_w_ref, dn_b_ref)

    # ---- final RMSNorm + lm_head ----
    hn = rms(h, lnf_ref)
    logits_ref[0] = matmul(hn, hd_w_ref, hd_b_ref).astype(logits_ref.dtype)


# =============================================================
# Jitted wrapper
# =============================================================
@jax.jit
def _text_decoder_jit(p, inputs_embeds, attention_mask):
    B, S, D = inputs_embeds.shape
    # Pad S to a sublane multiple (8) so block shapes stay (8,128)-aligned.
    S_pad = ((S + 7) // 8) * 8
    if S_pad != S:
        inputs_embeds = jnp.pad(inputs_embeds, ((0, 0), (0, S_pad - S), (0, 0)))
        attention_mask = jnp.pad(attention_mask, ((0, 0), (0, S_pad - S)))
    bias = jnp.where(attention_mask != 0, 0.0, NEG_INF).astype(jnp.float32)
    bias = bias.reshape(B, 1, S_pad)

    weights = [
        p["ln1_w"].reshape(1, D), p["qkv_w"], p["qkv_b"].reshape(1, -1),
        p["o_w"], p["o_b"].reshape(1, -1),
        p["ln2_w"].reshape(1, D), p["gu_w"], p["gu_b"].reshape(1, -1),
        p["dn_w"], p["dn_b"].reshape(1, -1),
        p["lnf_w"].reshape(1, D), p["head_w"], p["head_b"].reshape(1, -1),
    ]
    w_specs = [pl.BlockSpec(w.shape, lambda b: (0, 0)) for w in weights]

    kernel = functools.partial(_decoder_kernel, num_heads=NUM_HEADS, eps=RMS_EPS,
                               scale=1.0 / math.sqrt(D // NUM_HEADS))
    logits = pl.pallas_call(
        kernel,
        out_shape=jax.ShapeDtypeStruct((B, S_pad, VOCAB), jnp.float32),
        grid=(B,),
        in_specs=[pl.BlockSpec((1, S_pad, D), lambda b: (b, 0, 0)),
                  pl.BlockSpec((1, 1, S_pad), lambda b: (b, 0, 0))] + w_specs,
        out_specs=pl.BlockSpec((1, S_pad, VOCAB), lambda b: (b, 0, 0)),
        compiler_params=pltpu.CompilerParams(
            dimension_semantics=("parallel",)),
    )(inputs_embeds, bias, *weights)
    return logits[:, :S]


def text_decoder_forward(params, inputs_embeds, attention_mask=None):
    """TextDecoder.forward: inputs_embeds (B,S,D) -> logits (B,S,VOCAB)."""
    B, S, _ = inputs_embeds.shape
    if attention_mask is None:
        attention_mask = jnp.ones((B, S), jnp.int32)
    return _text_decoder_jit(params, inputs_embeds, attention_mask)


# =============================================================
# Pure-JAX reference (same bf16-matmul recipe) for correctness check
# =============================================================
def _reference_forward(p, emb, bias):
    B, S, D = emb.shape
    H, Dh = NUM_HEADS, D // NUM_HEADS

    def rms(x, w):
        return x * jax.lax.rsqrt(jnp.mean(x * x, -1, keepdims=True) + RMS_EPS) * w

    def mm(x, w, b):
        return jnp.dot(x.astype(jnp.bfloat16), w.astype(jnp.bfloat16),
                       preferred_element_type=jnp.float32) + b

    h = emb.astype(jnp.float32)
    hn = rms(h, p["ln1_w"])
    qkv = mm(hn, p["qkv_w"], p["qkv_b"])
    q, k, v = jnp.split(qkv, 3, axis=-1)
    q = q.reshape(B, S, H, Dh).transpose(0, 2, 1, 3)
    k = k.reshape(B, S, H, Dh).transpose(0, 2, 1, 3)
    v = v.reshape(B, S, H, Dh).transpose(0, 2, 1, 3)
    s = jnp.einsum('bhqd,bhkd->bhqk', q.astype(jnp.bfloat16), k.astype(jnp.bfloat16),
                   preferred_element_type=jnp.float32) / math.sqrt(Dh)
    iq = jnp.arange(S)[:, None]
    ik = jnp.arange(S)[None, :]
    causal = jnp.where(ik <= iq, 0.0, NEG_INF)
    s = s + causal[None, None] + bias[:, None]        # bias: (B,1,S) -> (B,1,1,S)
    pa = jax.nn.softmax(s, axis=-1)
    o = jnp.einsum('bhqk,bhkd->bhqd', pa.astype(jnp.bfloat16), v.astype(jnp.bfloat16),
                   preferred_element_type=jnp.float32)
    o = o.transpose(0, 2, 1, 3).reshape(B, S, D)
    h = h + mm(o, p["o_w"], p["o_b"])
    hn = rms(h, p["ln2_w"])
    gu = mm(hn, p["gu_w"], p["gu_b"])
    g, u = jnp.split(gu, 2, axis=-1)
    h = h + mm(g * jax.nn.sigmoid(g) * u, p["dn_w"], p["dn_b"])
    hn = rms(h, p["lnf_w"])
    return mm(hn, p["head_w"], p["head_b"])


# =============================================================
# Deterministic synthetic parameter init
# =============================================================
def init_params(key):
    ks = iter(jax.random.split(key, 16))

    def small(shape, scale=0.05):
        return jax.random.normal(next(ks), shape, DTYPE) * scale

    p = {}
    p["ln1_w"] = jnp.ones((TD_HIDDEN,), DTYPE)
    p["qkv_w"], p["qkv_b"] = small((TD_HIDDEN, 3 * TD_HIDDEN)), small((3 * TD_HIDDEN,), 0.01)
    p["o_w"], p["o_b"] = small((TD_HIDDEN, TD_HIDDEN)), small((TD_HIDDEN,), 0.01)
    p["ln2_w"] = jnp.ones((TD_HIDDEN,), DTYPE)
    p["gu_w"], p["gu_b"] = small((TD_HIDDEN, 2 * TD_FF)), small((2 * TD_FF,), 0.01)
    p["dn_w"], p["dn_b"] = small((TD_FF, TD_HIDDEN)), small((TD_HIDDEN,), 0.01)
    p["lnf_w"] = jnp.ones((TD_HIDDEN,), DTYPE)
    p["head_w"], p["head_b"] = small((TD_HIDDEN, VOCAB)), small((VOCAB,), 0.01)
    return p


# =============================================================
# main
# =============================================================
if __name__ == "__main__":
    key = jax.random.PRNGKey(0)
    pkey, ekey, e2key = jax.random.split(key, 3)
    params = init_params(pkey)

    # attention_mask=None path (the call pattern used by MyNet.forward)
    B, S = 2, 16
    emb = jax.random.normal(ekey, (B, S, TD_HIDDEN), DTYPE) * 0.02
    logits = text_decoder_forward(params, emb)
    jax.block_until_ready(logits)
    assert logits.shape == (B, S, VOCAB)
    ref = _reference_forward(params, emb, jnp.zeros((B, 1, S), jnp.float32))
    assert float(jnp.max(jnp.abs(logits - ref))) < 3e-2

    # ragged length + explicit attention_mask exercises the padding path
    S2 = 12
    emb2 = jax.random.normal(e2key, (B, S2, TD_HIDDEN), DTYPE) * 0.02
    mask2 = jnp.ones((B, S2), jnp.int32).at[:, -2:].set(0)
    logits2 = text_decoder_forward(params, emb2, mask2)
    jax.block_until_ready(logits2)
    assert logits2.shape == (B, S2, VOCAB)
    bias2 = jnp.where(mask2 != 0, 0.0, NEG_INF).astype(jnp.float32).reshape(B, 1, S2)
    ref2 = _reference_forward(params, emb2, bias2)
    assert float(jnp.max(jnp.abs(logits2 - ref2))) < 3e-2

    print("KERNEL_OK")
</pallas_src>

<mosaic_0001>
module attributes {stable_mosaic.version = 11 : i64} {
  func.func @_decoder_kernel(%arg0: i32, %arg1: memref<1x16x128xf32, #tpu.memory_space<vmem>>, %arg2: memref<1x1x16xf32, #tpu.memory_space<vmem>>, %arg3: memref<1x128xf32, #tpu.memory_space<vmem>>, %arg4: memref<128x384xf32, #tpu.memory_space<vmem>>, %arg5: memref<1x384xf32, #tpu.memory_space<vmem>>, %arg6: memref<128x128xf32, #tpu.memory_space<vmem>>, %arg7: memref<1x128xf32, #tpu.memory_space<vmem>>, %arg8: memref<1x128xf32, #tpu.memory_space<vmem>>, %arg9: memref<128x512xf32, #tpu.memory_space<vmem>>, %arg10: memref<1x512xf32, #tpu.memory_space<vmem>>, %arg11: memref<256x128xf32, #tpu.memory_space<vmem>>, %arg12: memref<1x128xf32, #tpu.memory_space<vmem>>, %arg13: memref<1x128xf32, #tpu.memory_space<vmem>>, %arg14: memref<128x256xf32, #tpu.memory_space<vmem>>, %arg15: memref<1x256xf32, #tpu.memory_space<vmem>>, %arg16: memref<1x16x256xf32, #tpu.memory_space<vmem>>) attributes {dimension_semantics = [#tpu.dimension_semantics<parallel>], iteration_bounds = array<i64: 2>, scalar_prefetch = 0 : i64, scratch_operands = 0 : i64, tpu.core_type = #tpu.core_type<tc>, window_params = [{transform_indices = @transform_0, window_bounds = array<i64: 1, 16, 128>}, {transform_indices = @transform_1, window_bounds = array<i64: 1, 1, 16>}, {pipeline_mode = #tpu.pipeline_mode<synchronous>, transform_indices = @transform_2, window_bounds = array<i64: 1, 128>}, {pipeline_mode = #tpu.pipeline_mode<synchronous>, transform_indices = @transform_3, window_bounds = array<i64: 128, 384>}, {pipeline_mode = #tpu.pipeline_mode<synchronous>, transform_indices = @transform_4, window_bounds = array<i64: 1, 384>}, {pipeline_mode = #tpu.pipeline_mode<synchronous>, transform_indices = @transform_5, window_bounds = array<i64: 128, 128>}, {pipeline_mode = #tpu.pipeline_mode<synchronous>, transform_indices = @transform_6, window_bounds = array<i64: 1, 128>}, {pipeline_mode = #tpu.pipeline_mode<synchronous>, transform_indices = @transform_7, window_bounds = array<i64: 1, 128>}, {pipeline_mode = #tpu.pipeline_mode<synchronous>, transform_indices = @transform_8, window_bounds = array<i64: 128, 512>}, {pipeline_mode = #tpu.pipeline_mode<synchronous>, transform_indices = @transform_9, window_bounds = array<i64: 1, 512>}, {pipeline_mode = #tpu.pipeline_mode<synchronous>, transform_indices = @transform_10, window_bounds = array<i64: 256, 128>}, {pipeline_mode = #tpu.pipeline_mode<synchronous>, transform_indices = @transform_11, window_bounds = array<i64: 1, 128>}, {pipeline_mode = #tpu.pipeline_mode<synchronous>, transform_indices = @transform_12, window_bounds = array<i64: 1, 128>}, {pipeline_mode = #tpu.pipeline_mode<synchronous>, transform_indices = @transform_13, window_bounds = array<i64: 128, 256>}, {pipeline_mode = #tpu.pipeline_mode<synchronous>, transform_indices = @transform_14, window_bounds = array<i64: 1, 256>}, {transform_indices = @transform_15, window_bounds = array<i64: 1, 16, 256>}]} {
    %c0 = arith.constant 0 : index
    %c0_0 = arith.constant 0 : index
    %c0_1 = arith.constant 0 : index
    %0 = vector.load %arg1[%c0, %c0_0, %c0_1] : memref<1x16x128xf32, #tpu.memory_space<vmem>>, vector<1x16x128xf32>
    %1 = vector.shape_cast %0 : vector<1x16x128xf32> to vector<16x128xf32>
    %c0_2 = arith.constant 0 : index
    %c0_3 = arith.constant 0 : index
    %c0_4 = arith.constant 0 : index
    %2 = vector.load %arg2[%c0_2, %c0_3, %c0_4] : memref<1x1x16xf32, #tpu.memory_space<vmem>>, vector<1x1x16xf32>
    %3 = vector.shape_cast %2 : vector<1x1x16xf32> to vector<1x16xf32>
    %4 = arith.mulf %1, %1 : vector<16x128xf32>
    %cst = arith.constant dense<0.000000e+00> : vector<16xf32>
    %5 = vector.multi_reduction <add>, %4, %cst [1] : vector<16x128xf32> to vector<16xf32>
    %6 = vector.shape_cast %5 : vector<16xf32> to vector<16x1xf32>
    %cst_5 = arith.constant 1.280000e+02 : f32
    %7 = vector.broadcast %cst_5 : f32 to vector<16x1xf32>
    %8 = arith.divf %6, %7 : vector<16x1xf32>
    %cst_6 = arith.constant 9.99999997E-7 : f32
    %9 = vector.broadcast %cst_6 : f32 to vector<16x1xf32>
    %10 = arith.addf %8, %9 : vector<16x1xf32>
    %11 = math.rsqrt %10 : vector<16x1xf32>
    %12 = vector.broadcast %11 : vector<16x1xf32> to vector<16x128xf32>
    %13 = arith.mulf %1, %12 : vector<16x128xf32>
    %c0_7 = arith.constant 0 : index
    %c0_8 = arith.constant 0 : index
    %14 = vector.load %arg3[%c0_7, %c0_8] : memref<1x128xf32, #tpu.memory_space<vmem>>, vector<1x128xf32>
    %15 = vector.broadcast %14 : vector<1x128xf32> to vector<16x128xf32>
    %16 = arith.mulf %13, %15 : vector<16x128xf32>
    %17 = arith.truncf %16 : vector<16x128xf32> to vector<16x128xbf16>
    %c0_9 = arith.constant 0 : index
    %c0_10 = arith.constant 0 : index
    %18 = vector.load %arg4[%c0_9, %c0_10] : memref<128x384xf32, #tpu.memory_space<vmem>>, vector<128x384xf32>
    %19 = arith.truncf %18 : vector<128x384xf32> to vector<128x384xbf16>
    %cst_11 = arith.constant dense<0.000000e+00> : vector<16x384xf32>
    %20 = tpu.matmul %17, %19, %cst_11 {dimension_numbers = #tpu.dot_dimension_numbers<[1], [0], [0], [1], [0, 0, 1, 1], [], []>} : vector<16x128xbf16>, vector<128x384xbf16>, vector<16x384xf32> -> vector<16x384xf32>
    %c0_12 = arith.constant 0 : index
    %c0_13 = arith.constant 0 : index
    %21 = vector.load %arg5[%c0_12, %c0_13] : memref<1x384xf32, #tpu.memory_space<vmem>>, vector<1x384xf32>
    %22 = vector.broadcast %21 : vector<1x384xf32> to vector<16x384xf32>
    %23 = arith.addf %20, %22 : vector<16x384xf32>
    %24 = tpu.iota {dimensions = array<i32: 0>} : vector<16x16xi32>
    %25 = tpu.iota {dimensions = array<i32: 1>} : vector<16x16xi32>
    %26 = arith.cmpi sle, %25, %24 : vector<16x16xi32>
    %cst_14 = arith.constant 0.000000e+00 : f32
    %cst_15 = arith.constant -1.000000e+30 : f32
    %27 = vector.broadcast %cst_14 : f32 to vector<16x16xf32>
    %28 = vector.broadcast %cst_15 : f32 to vector<16x16xf32>
    %29 = arith.select %26, %27, %28 : vector<16x16xi1>, vector<16x16xf32>
    %30 = vector.extract_strided_slice %23 {offsets = [0, 0], sizes = [16, 32], strides = [1, 1]} : vector<16x384xf32> to vector<16x32xf32>
    %31 = vector.extract_strided_slice %23 {offsets = [0, 128], sizes = [16, 32], strides = [1, 1]} : vector<16x384xf32> to vector<16x32xf32>
    %32 = vector.extract_strided_slice %23 {offsets = [0, 256], sizes = [16, 32], strides = [1, 1]} : vector<16x384xf32> to vector<16x32xf32>
    %33 = arith.truncf %30 : vector<16x32xf32> to vector<16x32xbf16>
    %34 = arith.truncf %31 : vector<16x32xf32> to vector<16x32xbf16>
    %cst_16 = arith.constant dense<0.000000e+00> : vector<16x16xf32>
    %35 = tpu.matmul %33, %34, %cst_16 {dimension_numbers = #tpu.dot_dimension_numbers<[1], [1], [0], [0], [0, 0, 1, 0], [], []>} : vector<16x32xbf16>, vector<16x32xbf16>, vector<16x16xf32> -> vector<16x16xf32>
    %cst_17 = arith.constant 0.176776692 : f32
    %36 = vector.broadcast %cst_17 : f32 to vector<16x16xf32>
    %37 = arith.mulf %35, %36 : vector<16x16xf32>
    %38 = arith.addf %37, %29 : vector<16x16xf32>
    %39 = vector.broadcast %3 : vector<1x16xf32> to vector<16x16xf32>
    %40 = arith.addf %38, %39 : vector<16x16xf32>
    %cst_18 = arith.constant dense<0xFF800000> : vector<16xf32>
    %41 = vector.multi_reduction <maximumf>, %40, %cst_18 [1] : vector<16x16xf32> to vector<16xf32>
    %42 = vector.shape_cast %41 : vector<16xf32> to vector<16x1xf32>
    %43 = vector.broadcast %42 : vector<16x1xf32> to vector<16x16xf32>
    %44 = arith.subf %40, %43 : vector<16x16xf32>
    %45 = math.exp %44 : vector<16x16xf32>
    %cst_19 = arith.constant dense<0.000000e+00> : vector<16xf32>
    %46 = vector.multi_reduction <add>, %45, %cst_19 [1] : vector<16x16xf32> to vector<16xf32>
    %47 = vector.shape_cast %46 : vector<16xf32> to vector<16x1xf32>
    %48 = tpu.reciprocal %47 {approx = true} : vector<16x1xf32> -> vector<16x1xf32>
    %49 = vector.broadcast %48 : vector<16x1xf32> to vector<16x16xf32>
    %50 = arith.mulf %45, %49 : vector<16x16xf32>
    %51 = arith.truncf %50 : vector<16x16xf32> to vector<16x16xbf16>
    %52 = arith.truncf %32 : vector<16x32xf32> to vector<16x32xbf16>
    %cst_20 = arith.constant dense<0.000000e+00> : vector<16x32xf32>
    %53 = tpu.matmul %51, %52, %cst_20 {dimension_numbers = #tpu.dot_dimension_numbers<[1], [0], [0], [1], [0, 0, 1, 1], [], []>} : vector<16x16xbf16>, vector<16x32xbf16>, vector<16x32xf32> -> vector<16x32xf32>
    %54 = vector.extract_strided_slice %23 {offsets = [0, 32], sizes = [16, 32], strides = [1, 1]} : vector<16x384xf32> to vector<16x32xf32>
    %55 = vector.extract_strided_slice %23 {offsets = [0, 160], sizes = [16, 32], strides = [1, 1]} : vector<16x384xf32> to vector<16x32xf32>
    %56 = vector.extract_strided_slice %23 {offsets = [0, 288], sizes = [16, 32], strides = [1, 1]} : vector<16x384xf32> to vector<16x32xf32>
    %57 = arith.truncf %54 : vector<16x32xf32> to vector<16x32xbf16>
    %58 = arith.truncf %55 : vector<16x32xf32> to vector<16x32xbf16>
    %cst_21 = arith.constant dense<0.000000e+00> : vector<16x16xf32>
    %59 = tpu.matmul %57, %58, %cst_21 {dimension_numbers = #tpu.dot_dimension_numbers<[1], [1], [0], [0], [0, 0, 1, 0], [], []>} : vector<16x32xbf16>, vector<16x32xbf16>, vector<16x16xf32> -> vector<16x16xf32>
    %cst_22 = arith.constant 0.176776692 : f32
    %60 = vector.broadcast %cst_22 : f32 to vector<16x16xf32>
    %61 = arith.mulf %59, %60 : vector<16x16xf32>
    %62 = arith.addf %61, %29 : vector<16x16xf32>
    %63 = vector.broadcast %3 : vector<1x16xf32> to vector<16x16xf32>
    %64 = arith.addf %62, %63 : vector<16x16xf32>
    %cst_23 = arith.constant dense<0xFF800000> : vector<16xf32>
    %65 = vector.multi_reduction <maximumf>, %64, %cst_23 [1] : vector<16x16xf32> to vector<16xf32>
    %66 = vector.shape_cast %65 : vector<16xf32> to vector<16x1xf32>
    %67 = vector.broadcast %66 : vector<16x1xf32> to vector<16x16xf32>
    %68 = arith.subf %64, %67 : vector<16x16xf32>
    %69 = math.exp %68 : vector<16x16xf32>
    %cst_24 = arith.constant dense<0.000000e+00> : vector<16xf32>
    %70 = vector.multi_reduction <add>, %69, %cst_24 [1] : vector<16x16xf32> to vector<16xf32>
    %71 = vector.shape_cast %70 : vector<16xf32> to vector<16x1xf32>
    %72 = tpu.reciprocal %71 {approx = true} : vector<16x1xf32> -> vector<16x1xf32>
    %73 = vector.broadcast %72 : vector<16x1xf32> to vector<16x16xf32>
    %74 = arith.mulf %69, %73 : vector<16x16xf32>
    %75 = arith.truncf %74 : vector<16x16xf32> to vector<16x16xbf16>
    %76 = arith.truncf %56 : vector<16x32xf32> to vector<16x32xbf16>
    %cst_25 = arith.constant dense<0.000000e+00> : vector<16x32xf32>
    %77 = tpu.matmul %75, %76, %cst_25 {dimension_numbers = #tpu.dot_dimension_numbers<[1], [0], [0], [1], [0, 0, 1, 1], [], []>} : vector<16x16xbf16>, vector<16x32xbf16>, vector<16x32xf32> -> vector<16x32xf32>
    %78 = vector.extract_strided_slice %23 {offsets = [0, 64], sizes = [16, 32], strides = [1, 1]} : vector<16x384xf32> to vector<16x32xf32>
    %79 = vector.extract_strided_slice %23 {offsets = [0, 192], sizes = [16, 32], strides = [1, 1]} : vector<16x384xf32> to vector<16x32xf32>
    %80 = vector.extract_strided_slice %23 {offsets = [0, 320], sizes = [16, 32], strides = [1, 1]} : vector<16x384xf32> to vector<16x32xf32>
    %81 = arith.truncf %78 : vector<16x32xf32> to vector<16x32xbf16>
    %82 = arith.truncf %79 : vector<16x32xf32> to vector<16x32xbf16>
    %cst_26 = arith.constant dense<0.000000e+00> : vector<16x16xf32>
    %83 = tpu.matmul %81, %82, %cst_26 {dimension_numbers = #tpu.dot_dimension_numbers<[1], [1], [0], [0], [0, 0, 1, 0], [], []>} : vector<16x32xbf16>, vector<16x32xbf16>, vector<16x16xf32> -> vector<16x16xf32>
    %cst_27 = arith.constant 0.176776692 : f32
    %84 = vector.broadcast %cst_27 : f32 to vector<16x16xf32>
    %85 = arith.mulf %83, %84 : vector<16x16xf32>
    %86 = arith.addf %85, %29 : vector<16x16xf32>
    %87 = vector.broadcast %3 : vector<1x16xf32> to vector<16x16xf32>
    %88 = arith.addf %86, %87 : vector<16x16xf32>
    %cst_28 = arith.constant dense<0xFF800000> : vector<16xf32>
    %89 = vector.multi_reduction <maximumf>, %88, %cst_28 [1] : vector<16x16xf32> to vector<16xf32>
    %90 = vector.shape_cast %89 : vector<16xf32> to vector<16x1xf32>
    %91 = vector.broadcast %90 : vector<16x1xf32> to vector<16x16xf32>
    %92 = arith.subf %88, %91 : vector<16x16xf32>
    %93 = math.exp %92 : vector<16x16xf32>
    %cst_29 = arith.constant dense<0.000000e+00> : vector<16xf32>
    %94 = vector.multi_reduction <add>, %93, %cst_29 [1] : vector<16x16xf32> to vector<16xf32>
    %95 = vector.shape_cast %94 : vector<16xf32> to vector<16x1xf32>
    %96 = tpu.reciprocal %95 {approx = true} : vector<16x1xf32> -> vector<16x1xf32>
    %97 = vector.broadcast %96 : vector<16x1xf32> to vector<16x16xf32>
    %98 = arith.mulf %93, %97 : vector<16x16xf32>
    %99 = arith.truncf %98 : vector<16x16xf32> to vector<16x16xbf16>
    %100 = arith.truncf %80 : vector<16x32xf32> to vector<16x32xbf16>
    %cst_30 = arith.constant dense<0.000000e+00> : vector<16x32xf32>
    %101 = tpu.matmul %99, %100, %cst_30 {dimension_numbers = #tpu.dot_dimension_numbers<[1], [0], [0], [1], [0, 0, 1, 1], [], []>} : vector<16x16xbf16>, vector<16x32xbf16>, vector<16x32xf32> -> vector<16x32xf32>
    %102 = vector.extract_strided_slice %23 {offsets = [0, 96], sizes = [16, 32], strides = [1, 1]} : vector<16x384xf32> to vector<16x32xf32>
    %103 = vector.extract_strided_slice %23 {offsets = [0, 224], sizes = [16, 32], strides = [1, 1]} : vector<16x384xf32> to vector<16x32xf32>
    %104 = vector.extract_strided_slice %23 {offsets = [0, 352], sizes = [16, 32], strides = [1, 1]} : vector<16x384xf32> to vector<16x32xf32>
    %105 = arith.truncf %102 : vector<16x32xf32> to vector<16x32xbf16>
    %106 = arith.truncf %103 : vector<16x32xf32> to vector<16x32xbf16>
    %cst_31 = arith.constant dense<0.000000e+00> : vector<16x16xf32>
    %107 = tpu.matmul %105, %106, %cst_31 {dimension_numbers = #tpu.dot_dimension_numbers<[1], [1], [0], [0], [0, 0, 1, 0], [], []>} : vector<16x32xbf16>, vector<16x32xbf16>, vector<16x16xf32> -> vector<16x16xf32>
    %cst_32 = arith.constant 0.176776692 : f32
    %108 = vector.broadcast %cst_32 : f32 to vector<16x16xf32>
    %109 = arith.mulf %107, %108 : vector<16x16xf32>
    %110 = arith.addf %109, %29 : vector<16x16xf32>
    %111 = vector.broadcast %3 : vector<1x16xf32> to vector<16x16xf32>
    %112 = arith.addf %110, %111 : vector<16x16xf32>
    %cst_33 = arith.constant dense<0xFF800000> : vector<16xf32>
    %113 = vector.multi_reduction <maximumf>, %112, %cst_33 [1] : vector<16x16xf32> to vector<16xf32>
    %114 = vector.shape_cast %113 : vector<16xf32> to vector<16x1xf32>
    %115 = vector.broadcast %114 : vector<16x1xf32> to vector<16x16xf32>
    %116 = arith.subf %112, %115 : vector<16x16xf32>
    %117 = math.exp %116 : vector<16x16xf32>
    %cst_34 = arith.constant dense<0.000000e+00> : vector<16xf32>
    %118 = vector.multi_reduction <add>, %117, %cst_34 [1] : vector<16x16xf32> to vector<16xf32>
    %119 = vector.shape_cast %118 : vector<16xf32> to vector<16x1xf32>
    %120 = tpu.reciprocal %119 {approx = true} : vector<16x1xf32> -> vector<16x1xf32>
    %121 = vector.broadcast %120 : vector<16x1xf32> to vector<16x16xf32>
    %122 = arith.mulf %117, %121 : vector<16x16xf32>
    %123 = arith.truncf %122 : vector<16x16xf32> to vector<16x16xbf16>
    %124 = arith.truncf %104 : vector<16x32xf32> to vector<16x32xbf16>
    %cst_35 = arith.constant dense<0.000000e+00> : vector<16x32xf32>
    %125 = tpu.matmul %123, %124, %cst_35 {dimension_numbers = #tpu.dot_dimension_numbers<[1], [0], [0], [1], [0, 0, 1, 1], [], []>} : vector<16x16xbf16>, vector<16x32xbf16>, vector<16x32xf32> -> vector<16x32xf32>
    %126 = tpu.concatenate %53, %77, %101, %125 in 1 : vector<16x32xf32>, vector<16x32xf32>, vector<16x32xf32>, vector<16x32xf32> -> vector<16x128xf32>
    %127 = arith.truncf %126 : vector<16x128xf32> to vector<16x128xbf16>
    %c0_36 = arith.constant 0 : index
    %c0_37 = arith.constant 0 : index
    %128 = vector.load %arg6[%c0_36, %c0_37] : memref<128x128xf32, #tpu.memory_space<vmem>>, vector<128x128xf32>
    %129 = arith.truncf %128 : vector<128x128xf32> to vector<128x128xbf16>
    %cst_38 = arith.constant dense<0.000000e+00> : vector<16x128xf32>
    %130 = tpu.matmul %127, %129, %cst_38 {dimension_numbers = #tpu.dot_dimension_numbers<[1], [0], [0], [1], [0, 0, 1, 1], [], []>} : vector<16x128xbf16>, vector<128x128xbf16>, vector<16x128xf32> -> vector<16x128xf32>
    %c0_39 = arith.constant 0 : index
    %c0_40 = arith.constant 0 : index
    %131 = vector.load %arg7[%c0_39, %c0_40] : memref<1x128xf32, #tpu.memory_space<vmem>>, vector<1x128xf32>
    %132 = vector.broadcast %131 : vector<1x128xf32> to vector<16x128xf32>
    %133 = arith.addf %130, %132 : vector<16x128xf32>
    %134 = arith.addf %1, %133 : vector<16x128xf32>
    %135 = arith.mulf %134, %134 : vector<16x128xf32>
    %cst_41 = arith.constant dense<0.000000e+00> : vector<16xf32>
    %136 = vector.multi_reduction <add>, %135, %cst_41 [1] : vector<16x128xf32> to vector<16xf32>
    %137 = vector.shape_cast %136 : vector<16xf32> to vector<16x1xf32>
    %cst_42 = arith.constant 1.280000e+02 : f32
    %138 = vector.broadcast %cst_42 : f32 to vector<16x1xf32>
    %139 = arith.divf %137, %138 : vector<16x1xf32>
    %cst_43 = arith.constant 9.99999997E-7 : f32
    %140 = vector.broadcast %cst_43 : f32 to vector<16x1xf32>
    %141 = arith.addf %139, %140 : vector<16x1xf32>
    %142 = math.rsqrt %141 : vector<16x1xf32>
    %143 = vector.broadcast %142 : vector<16x1xf32> to vector<16x128xf32>
    %144 = arith.mulf %134, %143 : vector<16x128xf32>
    %c0_44 = arith.constant 0 : index
    %c0_45 = arith.constant 0 : index
    %145 = vector.load %arg8[%c0_44, %c0_45] : memref<1x128xf32, #tpu.memory_space<vmem>>, vector<1x128xf32>
    %146 = vector.broadcast %145 : vector<1x128xf32> to vector<16x128xf32>
    %147 = arith.mulf %144, %146 : vector<16x128xf32>
    %148 = arith.truncf %147 : vector<16x128xf32> to vector<16x128xbf16>
    %c0_46 = arith.constant 0 : index
    %c0_47 = arith.constant 0 : index
    %149 = vector.load %arg9[%c0_46, %c0_47] : memref<128x512xf32, #tpu.memory_space<vmem>>, vector<128x512xf32>
    %150 = arith.truncf %149 : vector<128x512xf32> to vector<128x512xbf16>
    %cst_48 = arith.constant dense<0.000000e+00> : vector<16x512xf32>
    %151 = tpu.matmul %148, %150, %cst_48 {dimension_numbers = #tpu.dot_dimension_numbers<[1], [0], [0], [1], [0, 0, 1, 1], [], []>} : vector<16x128xbf16>, vector<128x512xbf16>, vector<16x512xf32> -> vector<16x512xf32>
    %c0_49 = arith.constant 0 : index
    %c0_50 = arith.constant 0 : index
    %152 = vector.load %arg10[%c0_49, %c0_50] : memref<1x512xf32, #tpu.memory_space<vmem>>, vector<1x512xf32>
    %153 = vector.broadcast %152 : vector<1x512xf32> to vector<16x512xf32>
    %154 = arith.addf %151, %153 : vector<16x512xf32>
    %155 = vector.extract_strided_slice %154 {offsets = [0, 0], sizes = [16, 256], strides = [1, 1]} : vector<16x512xf32> to vector<16x256xf32>
    %156 = vector.extract_strided_slice %154 {offsets = [0, 256], sizes = [16, 256], strides = [1, 1]} : vector<16x512xf32> to vector<16x256xf32>
    %157 = arith.negf %155 : vector<16x256xf32>
    %158 = math.exp %157 : vector<16x256xf32>
    %cst_51 = arith.constant 1.000000e+00 : f32
    %159 = vector.broadcast %cst_51 : f32 to vector<16x256xf32>
    %160 = arith.addf %159, %158 : vector<16x256xf32>
    %161 = arith.divf %159, %160 : vector<16x256xf32>
    %162 = arith.mulf %155, %161 : vector<16x256xf32>
    %163 = arith.mulf %162, %156 : vector<16x256xf32>
    %164 = arith.truncf %163 : vector<16x256xf32> to vector<16x256xbf16>
    %c0_52 = arith.constant 0 : index
    %c0_53 = arith.constant 0 : index
    %165 = vector.load %arg11[%c0_52, %c0_53] : memref<256x128xf32, #tpu.memory_space<vmem>>, vector<256x128xf32>
    %166 = arith.truncf %165 : vector<256x128xf32> to vector<256x128xbf16>
    %cst_54 = arith.constant dense<0.000000e+00> : vector<16x128xf32>
    %167 = tpu.matmul %164, %166, %cst_54 {dimension_numbers = #tpu.dot_dimension_numbers<[1], [0], [0], [1], [0, 0, 1, 1], [], []>} : vector<16x256xbf16>, vector<256x128xbf16>, vector<16x128xf32> -> vector<16x128xf32>
    %c0_55 = arith.constant 0 : index
    %c0_56 = arith.constant 0 : index
    %168 = vector.load %arg12[%c0_55, %c0_56] : memref<1x128xf32, #tpu.memory_space<vmem>>, vector<1x128xf32>
    %169 = vector.broadcast %168 : vector<1x128xf32> to vector<16x128xf32>
    %170 = arith.addf %167, %169 : vector<16x128xf32>
    %171 = arith.addf %134, %170 : vector<16x128xf32>
    %172 = arith.mulf %171, %171 : vector<16x128xf32>
    %cst_57 = arith.constant dense<0.000000e+00> : vector<16xf32>
    %173 = vector.multi_reduction <add>, %172, %cst_57 [1] : vector<16x128xf32> to vector<16xf32>
    %174 = vector.shape_cast %173 : vector<16xf32> to vector<16x1xf32>
    %cst_58 = arith.constant 1.280000e+02 : f32
    %175 = vector.broadcast %cst_58 : f32 to vector<16x1xf32>
    %176 = arith.divf %174, %175 : vector<16x1xf32>
    %cst_59 = arith.constant 9.99999997E-7 : f32
    %177 = vector.broadcast %cst_59 : f32 to vector<16x1xf32>
    %178 = arith.addf %176, %177 : vector<16x1xf32>
    %179 = math.rsqrt %178 : vector<16x1xf32>
    %180 = vector.broadcast %179 : vector<16x1xf32> to vector<16x128xf32>
    %181 = arith.mulf %171, %180 : vector<16x128xf32>
    %c0_60 = arith.constant 0 : index
    %c0_61 = arith.constant 0 : index
    %182 = vector.load %arg13[%c0_60, %c0_61] : memref<1x128xf32, #tpu.memory_space<vmem>>, vector<1x128xf32>
    %183 = vector.broadcast %182 : vector<1x128xf32> to vector<16x128xf32>
    %184 = arith.mulf %181, %183 : vector<16x128xf32>
    %185 = arith.truncf %184 : vector<16x128xf32> to vector<16x128xbf16>
    %c0_62 = arith.constant 0 : index
    %c0_63 = arith.constant 0 : index
    %186 = vector.load %arg14[%c0_62, %c0_63] : memref<128x256xf32, #tpu.memory_space<vmem>>, vector<128x256xf32>
    %187 = arith.truncf %186 : vector<128x256xf32> to vector<128x256xbf16>
    %cst_64 = arith.constant dense<0.000000e+00> : vector<16x256xf32>
    %188 = tpu.matmul %185, %187, %cst_64 {dimension_numbers = #tpu.dot_dimension_numbers<[1], [0], [0], [1], [0, 0, 1, 1], [], []>} : vector<16x128xbf16>, vector<128x256xbf16>, vector<16x256xf32> -> vector<16x256xf32>
    %c0_65 = arith.constant 0 : index
    %c0_66 = arith.constant 0 : index
    %189 = vector.load %arg15[%c0_65, %c0_66] : memref<1x256xf32, #tpu.memory_space<vmem>>, vector<1x256xf32>
    %190 = vector.broadcast %189 : vector<1x256xf32> to vector<16x256xf32>
    %191 = arith.addf %188, %190 : vector<16x256xf32>
    %c0_67 = arith.constant 0 : index
    %c0_68 = arith.constant 0 : index
    %c0_69 = arith.constant 0 : index
    %192 = vector.load %arg16[%c0_67, %c0_68, %c0_69] : memref<1x16x256xf32, #tpu.memory_space<vmem>>, vector<1x16x256xf32>
    %193 = vector.shape_cast %192 : vector<1x16x256xf32> to vector<16x256xf32>
    %194 = vector.shape_cast %191 : vector<16x256xf32> to vector<1x16x256xf32>
    tpu.vector_store %arg16[%c0_67, %c0_68, %c0_69], %194 {strides = array<i32>} : memref<1x16x256xf32, #tpu.memory_space<vmem>>, vector<1x16x256xf32>,
    return
  }
  func.func @transform_0(%arg0: i32) -> (i32, i32, i32) {
    %c0_i32 = arith.constant 0 : i32
    %c0_i32_0 = arith.constant 0 : i32
    %c0_i32_1 = arith.constant 0 : i32
    return %arg0, %c0_i32, %c0_i32_0 : i32, i32, i32
  }
  func.func @transform_1(%arg0: i32) -> (i32, i32, i32) {
    %c0_i32 = arith.constant 0 : i32
    %c0_i32_0 = arith.constant 0 : i32
    %c0_i32_1 = arith.constant 0 : i32
    return %arg0, %c0_i32, %c0_i32_0 : i32, i32, i32
  }
  func.func @transform_2(%arg0: i32) -> (i32, i32) {
    %c0_i32 = arith.constant 0 : i32
    %c0_i32_0 = arith.constant 0 : i32
    %c0_i32_1 = arith.constant 0 : i32
    return %c0_i32, %c0_i32_0 : i32, i32
  }
  func.func @transform_3(%arg0: i32) -> (i32, i32) {
    %c0_i32 = arith.constant 0 : i32
    %c0_i32_0 = arith.constant 0 : i32
    %c0_i32_1 = arith.constant 0 : i32
    return %c0_i32, %c0_i32_0 : i32, i32
  }
  func.func @transform_4(%arg0: i32) -> (i32, i32) {
    %c0_i32 = arith.constant 0 : i32
    %c0_i32_0 = arith.constant 0 : i32
    %c0_i32_1 = arith.constant 0 : i32
    return %c0_i32, %c0_i32_0 : i32, i32
  }
  func.func @transform_5(%arg0: i32) -> (i32, i32) {
    %c0_i32 = arith.constant 0 : i32
    %c0_i32_0 = arith.constant 0 : i32
    %c0_i32_1 = arith.constant 0 : i32
    return %c0_i32, %c0_i32_0 : i32, i32
  }
  func.func @transform_6(%arg0: i32) -> (i32, i32) {
    %c0_i32 = arith.constant 0 : i32
    %c0_i32_0 = arith.constant 0 : i32
    %c0_i32_1 = arith.constant 0 : i32
    return %c0_i32, %c0_i32_0 : i32, i32
  }
  func.func @transform_7(%arg0: i32) -> (i32, i32) {
    %c0_i32 = arith.constant 0 : i32
    %c0_i32_0 = arith.constant 0 : i32
    %c0_i32_1 = arith.constant 0 : i32
    return %c0_i32, %c0_i32_0 : i32, i32
  }
  func.func @transform_8(%arg0: i32) -> (i32, i32) {
    %c0_i32 = arith.constant 0 : i32
    %c0_i32_0 = arith.constant 0 : i32
    %c0_i32_1 = arith.constant 0 : i32
    return %c0_i32, %c0_i32_0 : i32, i32
  }
  func.func @transform_9(%arg0: i32) -> (i32, i32) {
    %c0_i32 = arith.constant 0 : i32
    %c0_i32_0 = arith.constant 0 : i32
    %c0_i32_1 = arith.constant 0 : i32
    return %c0_i32, %c0_i32_0 : i32, i32
  }
  func.func @transform_10(%arg0: i32) -> (i32, i32) {
    %c0_i32 = arith.constant 0 : i32
    %c0_i32_0 = arith.constant 0 : i32
    %c0_i32_1 = arith.constant 0 : i32
    return %c0_i32, %c0_i32_0 : i32, i32
  }
  func.func @transform_11(%arg0: i32) -> (i32, i32) {
    %c0_i32 = arith.constant 0 : i32
    %c0_i32_0 = arith.constant 0 : i32
    %c0_i32_1 = arith.constant 0 : i32
    return %c0_i32, %c0_i32_0 : i32, i32
  }
  func.func @transform_12(%arg0: i32) -> (i32, i32) {
    %c0_i32 = arith.constant 0 : i32
    %c0_i32_0 = arith.constant 0 : i32
    %c0_i32_1 = arith.constant 0 : i32
    return %c0_i32, %c0_i32_0 : i32, i32
  }
  func.func @transform_13(%arg0: i32) -> (i32, i32) {
    %c0_i32 = arith.constant 0 : i32
    %c0_i32_0 = arith.constant 0 : i32
    %c0_i32_1 = arith.constant 0 : i32
    return %c0_i32, %c0_i32_0 : i32, i32
  }
  func.func @transform_14(%arg0: i32) -> (i32, i32) {
    %c0_i32 = arith.constant 0 : i32
    %c0_i32_0 = arith.constant 0 : i32
    %c0_i32_1 = arith.constant 0 : i32
    return %c0_i32, %c0_i32_0 : i32, i32
  }
  func.func @transform_15(%arg0: i32) -> (i32, i32, i32) {
    %c0_i32 = arith.constant 0 : i32
    %c0_i32_0 = arith.constant 0 : i32
    %c0_i32_1 = arith.constant 0 : i32
    return %arg0, %c0_i32, %c0_i32_0 : i32, i32, i32
  }
}

</mosaic_0001>

<llo_original>
// kernel: _text_decoder_jit.1
$region0: #{_text_decoder_jit.1}
  #allocation0 [shape = 'u32[]', space=smem, size = 0x4, offset = 0x4, fixed_abs, tag = 'smem constant byte address 0x4 - core index']
  #allocation1 [shape = 'u32[144,128]{1,0:T(1,128)}', space=vmem, size = 0x12000, scoped, tag = 'internal scratch']
  %s0 = inlined_call_operand.vmem [shape: f32[2,16,128], index: 0, kind: input, shape index: {}]
  %s1 = inlined_call_operand.vmem [shape: f32[2,1,16], index: 1, kind: input, shape index: {}]
  %s2 = inlined_call_operand.vmem [shape: f32[1,128], index: 2, kind: input, shape index: {}]
  %s3 = inlined_call_operand.hbm [shape: f32[128,384], index: 3, kind: input, shape index: {}]
  %s4 = inlined_call_operand.vmem [shape: f32[1,384], index: 4, kind: input, shape index: {}]
  %s5 = inlined_call_operand.hbm [shape: f32[128,128], index: 5, kind: input, shape index: {}]
  %s6 = inlined_call_operand.vmem [shape: f32[1,128], index: 6, kind: input, shape index: {}]
  %s7 = inlined_call_operand.vmem [shape: f32[1,128], index: 7, kind: input, shape index: {}]
  %s8 = inlined_call_operand.hbm [shape: f32[128,512], index: 8, kind: input, shape index: {}]
  %s9 = inlined_call_operand.vmem [shape: f32[1,512], index: 9, kind: input, shape index: {}]
  %s10 = inlined_call_operand.hbm [shape: f32[256,128], index: 10, kind: input, shape index: {}]
  %s11 = inlined_call_operand.vmem [shape: f32[1,128], index: 11, kind: input, shape index: {}]
  %s12 = inlined_call_operand.vmem [shape: f32[1,128], index: 12, kind: input, shape index: {}]
  %s13 = inlined_call_operand.hbm [shape: f32[128,256], index: 13, kind: input, shape index: {}]
  %s14 = inlined_call_operand.vmem [shape: f32[1,256], index: 14, kind: input, shape index: {}]
  %s15 = inlined_call_operand.hbm [shape: f32[2,16,256], index: 15, kind: output, shape index: {}]
  %s16 = sld [smem:[#allocation0]]
  $region113: #{_text_decoder_jit.1} parent=0
    _
  %s18 = ssub.s32 1, %s16
  %s19 = scalar_select 0, %s18, %s16
  $region1: #{_text_decoder_jit.1} parent=0
    #allocation2 [shape = 'u8[196608]{0}', space=vmem, size = 0x30000, scoped, tag = 'input window, operand 3, single buffered']
    #allocation3 [shape = 's32[2]{0}', space=sflag, size = 0x8, scoped, tag = 'scoped memory for _text_decoder_jit.1']
    #allocation4 [shape = 's32[2]{0}', space=sflag, size = 0x8, scoped, tag = 'scoped memory for _text_decoder_jit.1']
    #allocation5 [shape = 'u8[65536]{0}', space=vmem, size = 0x10000, scoped, tag = 'input window, operand 5, single buffered']
    #allocation6 [shape = 's32[1]{0}', space=sflag, size = 0x4, scoped, tag = 'scoped memory for _text_decoder_jit.1']
    #allocation7 [shape = 'u8[262144]{0}', space=vmem, size = 0x40000, scoped, tag = 'input window, operand 8, single buffered']
    #allocation8 [shape = 'u8[131072]{0}', space=vmem, size = 0x20000, scoped, tag = 'input window, operand 10, single buffered']
    #allocation9 [shape = 's32[1]{0}', space=sflag, size = 0x4, scoped, tag = 'scoped memory for _text_decoder_jit.1']
    #allocation10 [shape = 'u8[131072]{0}', space=vmem, size = 0x20000, scoped, tag = 'input window, operand 13, single buffered']
    #allocation11 [shape = 'u8[32768]{0}', space=vmem, size = 0x8000, scoped, tag = 'output window, operand 0']
    %20 = vsyncpa [#allocation3], 0
    %21 = vsyncpa [#allocation6], 0
    %22 = vsyncpa [#allocation9], 0
    %23 = vsyncpa [#allocation4], 0
    %s24 = scalar_lea.sflag [#allocation4], 1
    %25 = vsyncpa %s24, 0
    loop: start=0, step=1, limit=4
    $region2: #{_text_decoder_jit.1} parent=1 // loop_pre_header
      _
    $region3: #{_text_decoder_jit.1} parent=1 // loop_header
      %s27 = sphi 0, %s31
      %p28 = scmp.ge.s32.totalorder %s27, 4
      %s37 = sphi 0, %s39
      %s40 = sphi 0, %s37
      %s41 = sphi 0, %s40
      %s57 = sphi 0, %s41
      %s63 = sphi 0, %s65
      %s66 = sphi 0, %s63
      %s67 = sphi 0, %s66
      %s83 = sphi 0, %s67
      %s87 = sphi 0, %s87
      %s89 = sphi 0, %s87
      %s90 = sphi 0, %s89
      %s104 = sphi 0, %s90
      %s108 = sphi 0, %s108
      %s110 = sphi 0, %s108
      %s111 = sphi 0, %s110
      %s125 = sphi 0, %s111
      %s129 = sphi 0, %s129
      %s131 = sphi 0, %s129
      %s132 = sphi 0, %s131
      %s146 = sphi 0, %s132
      %s150 = sphi 0, %s150
      %s152 = sphi 0, %s150
      %s153 = sphi 0, %s152
      %s167 = sphi 0, %s153
      %s171 = sphi 0, %s171
      %s173 = sphi 0, %s171
      %s174 = sphi 0, %s173
      %s188 = sphi 0, %s174
      %s192 = sphi 0, %s192
      %s194 = sphi 0, %s192
      %s195 = sphi 0, %s194
      %s209 = sphi 0, %s195
      %s213 = sphi 0, %s213
      %s215 = sphi 0, %s213
      %s216 = sphi 0, %s215
      %s230 = sphi 0, %s216
      %s234 = sphi 0, %s234
      %s236 = sphi 0, %s234
      %s237 = sphi 0, %s236
      %s251 = sphi 0, %s237
      %s255 = sphi 0, %s255
      %s257 = sphi 0, %s255
      %s258 = sphi 0, %s257
      %s272 = sphi 0, %s258
      %s276 = sphi 0, %s276
      %s278 = sphi 0, %s276
      %s279 = sphi 0, %s278
      %s293 = sphi 0, %s279
      %s297 = sphi 0, %s297
      %s299 = sphi 0, %s297
      %s300 = sphi 0, %s299
      %s314 = sphi 0, %s300
      %s318 = sphi 0, %s318
      %s320 = sphi 0, %s318
      %s321 = sphi 0, %s320
      %s335 = sphi 0, %s321
      %s339 = sphi 0, %s339
      %s341 = sphi 0, %s339
      %s342 = sphi 0, %s341
      %s356 = sphi 0, %s342
      %s362 = sphi 0, %s364
      %s365 = sphi 0, %s362
      %s366 = sphi 0, %s365
      %s382 = sphi 0, %s366
    $region4: #{_text_decoder_jit.1} parent=1 // loop_header_branch
      %30 = sbr.rel (%p28) target = $region8
    $region5: #{_text_decoder_jit.1} parent=1 // loop_body
      %s32 = ssub.s32 %s27, 1
      %s33 = ssub.s32 %s27, 2
      %s34 = sadd.s32 %s27, 1
      %s35 = ssub.s32 %s27, %s34
      %p36 = scmp.eq.s32.totalorder %s35, 0
      %s38 = sadd.s32 %s37, 1
      %s39 = scalar_select %p36, %s37, %s38
      %p42 = pneg %p36
      %p43 = scmp.eq.s32.totalorder %s27, 1
      %p44 = por %p42, %p43
      %p45 = scmp.ne.s32.totalorder %s37, %s40
      %p46 = scmp.eq.s32.totalorder %s27, 0
      %p47 = por %p45, %p46
      %p48 = scmp.ne.s32.totalorder %s37, %s40
      %p49 = scmp.eq.s32.totalorder %s32, 1
      %p50 = por %p48, %p49
      %p51 = scmp.ne.s32.totalorder %s40, %s41
      %p52 = scmp.eq.s32.totalorder %s32, 0
      %p53 = por %p51, %p52
      %p54 = scmp.ne.s32.totalorder %s40, %s41
      %p55 = scmp.eq.s32.totalorder %s33, 1
      %p56 = por %p54, %p55
      %p58 = scmp.ne.s32.totalorder %s41, %s57
      %p59 = scmp.eq.s32.totalorder %s33, 0
      %p60 = por %p58, %p59
      %s61 = ssub.s32 %s27, %s34
      %p62 = scmp.eq.s32.totalorder %s61, 0
      %s64 = sadd.s32 %s63, 1
      %s65 = scalar_select %p62, %s63, %s64
      %p68 = pneg %p62
      %p69 = scmp.eq.s32.totalorder %s27, 1
      %p70 = por %p68, %p69
      %p71 = scmp.ne.s32.totalorder %s63, %s66
      %p72 = scmp.eq.s32.totalorder %s27, 0
      %p73 = por %p71, %p72
      %p74 = scmp.ne.s32.totalorder %s63, %s66
      %p75 = scmp.eq.s32.totalorder %s32, 1
      %p76 = por %p74, %p75
      %p77 = scmp.ne.s32.totalorder %s66, %s67
      %p78 = scmp.eq.s32.totalorder %s32, 0
      %p79 = por %p77, %p78
      %p80 = scmp.ne.s32.totalorder %s66, %s67
      %p81 = scmp.eq.s32.totalorder %s33, 1
      %p82 = por %p80, %p81
      %p84 = scmp.ne.s32.totalorder %s67, %s83
      %p85 = scmp.eq.s32.totalorder %s33, 0
      %p86 = por %p84, %p85
      %s88 = sadd.s32 %s87, 1
      %p91 = scmp.eq.s32.totalorder %s27, 1
      %p92 = scmp.ne.s32.totalorder %s87, %s89
      %p93 = scmp.eq.s32.totalorder %s27, 0
      %p94 = por %p92, %p93
      %p95 = scmp.ne.s32.totalorder %s87, %s89
      %p96 = scmp.eq.s32.totalorder %s32, 1
      %p97 = por %p95, %p96
      %p98 = scmp.ne.s32.totalorder %s89, %s90
      %p99 = scmp.eq.s32.totalorder %s32, 0
      %p100 = por %p98, %p99
      %p101 = scmp.ne.s32.totalorder %s89, %s90
      %p102 = scmp.eq.s32.totalorder %s33, 1
      %p103 = por %p101, %p102
      %p105 = scmp.ne.s32.totalorder %s90, %s104
      %p106 = scmp.eq.s32.totalorder %s33, 0
      %p107 = por %p105, %p106
      %s109 = sadd.s32 %s108, 1
      %p112 = scmp.eq.s32.totalorder %s27, 1
      %p113 = scmp.ne.s32.totalorder %s108, %s110
      %p114 = scmp.eq.s32.totalorder %s27, 0
      %p115 = por %p113, %p114
      %p116 = scmp.ne.s32.totalorder %s108, %s110
      %p117 = scmp.eq.s32.totalorder %s32, 1
      %p118 = por %p116, %p117
      %p119 = scmp.ne.s32.totalorder %s110, %s111
      %p120 = scmp.eq.s32.totalorder %s32, 0
      %p121 = por %p119, %p120
      %p122 = scmp.ne.s32.totalorder %s110, %s111
      %p123 = scmp.eq.s32.totalorder %s33, 1
      %p124 = por %p122, %p123
      %p126 = scmp.ne.s32.totalorder %s111, %s125
      %p127 = scmp.eq.s32.totalorder %s33, 0
      %p128 = por %p126, %p127
      %s130 = sadd.s32 %s129, 1
      %p133 = scmp.eq.s32.totalorder %s27, 1
      %p134 = scmp.ne.s32.totalorder %s129, %s131
      %p135 = scmp.eq.s32.totalorder %s27, 0
      %p136 = por %p134, %p135
      %p137 = scmp.ne.s32.totalorder %s129, %s131
      %p138 = scmp.eq.s32.totalorder %s32, 1
      %p139 = por %p137, %p138
      %p140 = scmp.ne.s32.totalorder %s131, %s132
      %p141 = scmp.eq.s32.totalorder %s32, 0
      %p142 = por %p140, %p141
      %p143 = scmp.ne.s32.totalorder %s131, %s132
      %p144 = scmp.eq.s32.totalorder %s33, 1
      %p145 = por %p143, %p144
      %p147 = scmp.ne.s32.totalorder %s132, %s146
      %p148 = scmp.eq.s32.totalorder %s33, 0
      %p149 = por %p147, %p148
      %s151 = sadd.s32 %s150, 1
      %p154 = scmp.eq.s32.totalorder %s27, 1
      %p155 = scmp.ne.s32.totalorder %s150, %s152
      %p156 = scmp.eq.s32.totalorder %s27, 0
      %p157 = por %p155, %p156
      %p158 = scmp.ne.s32.totalorder %s150, %s152
      %p159 = scmp.eq.s32.totalorder %s32, 1
      %p160 = por %p158, %p159
      %p161 = scmp.ne.s32.totalorder %s152, %s153
      %p162 = scmp.eq.s32.totalorder %s32, 0
      %p163 = por %p161, %p162
      %p164 = scmp.ne.s32.totalorder %s152, %s153
      %p165 = scmp.eq.s32.totalorder %s33, 1
      %p166 = por %p164, %p165
      %p168 = scmp.ne.s32.totalorder %s153, %s167
      %p169 = scmp.eq.s32.totalorder %s33, 0
      %p170 = por %p168, %p169
      %s172 = sadd.s32 %s171, 1
      %p175 = scmp.eq.s32.totalorder %s27, 1
      %p176 = scmp.ne.s32.totalorder %s171, %s173
      %p177 = scmp.eq.s32.totalorder %s27, 0
      %p178 = por %p176, %p177
      %p179 = scmp.ne.s32.totalorder %s171, %s173
      %p180 = scmp.eq.s32.totalorder %s32, 1
      %p181 = por %p179, %p180
      %p182 = scmp.ne.s32.totalorder %s173, %s174
      %p183 = scmp.eq.s32.totalorder %s32, 0
      %p184 = por %p182, %p183
      %p185 = scmp.ne.s32.totalorder %s173, %s174
      %p186 = scmp.eq.s32.totalorder %s33, 1
      %p187 = por %p185, %p186
      %p189 = scmp.ne.s32.totalorder %s174, %s188
      %p190 = scmp.eq.s32.totalorder %s33, 0
      %p191 = por %p189, %p190
      %s193 = sadd.s32 %s192, 1
      %p196 = scmp.eq.s32.totalorder %s27, 1
      %p197 = scmp.ne.s32.totalorder %s192, %s194
      %p198 = scmp.eq.s32.totalorder %s27, 0
      %p199 = por %p197, %p198
      %p200 = scmp.ne.s32.totalorder %s192, %s194
      %p201 = scmp.eq.s32.totalorder %s32, 1
      %p202 = por %p200, %p201
      %p203 = scmp.ne.s32.totalorder %s194, %s195
      %p204 = scmp.eq.s32.totalorder %s32, 0
      %p205 = por %p203, %p204
      %p206 = scmp.ne.s32.totalorder %s194, %s195
      %p207 = scmp.eq.s32.totalorder %s33, 1
      %p208 = por %p206, %p207
      %p210 = scmp.ne.s32.totalorder %s195, %s209
      %p211 = scmp.eq.s32.totalorder %s33, 0
      %p212 = por %p210, %p211
      %s214 = sadd.s32 %s213, 1
      %p217 = scmp.eq.s32.totalorder %s27, 1
      %p218 = scmp.ne.s32.totalorder %s213, %s215
      %p219 = scmp.eq.s32.totalorder %s27, 0
      %p220 = por %p218, %p219
      %p221 = scmp.ne.s32.totalorder %s213, %s215
      %p222 = scmp.eq.s32.totalorder %s32, 1
      %p223 = por %p221, %p222
      %p224 = scmp.ne.s32.totalorder %s215, %s216
      %p225 = scmp.eq.s32.totalorder %s32, 0
      %p226 = por %p224, %p225
      %p227 = scmp.ne.s32.totalorder %s215, %s216
      %p228 = scmp.eq.s32.totalorder %s33, 1
      %p229 = por %p227, %p228
      %p231 = scmp.ne.s32.totalorder %s216, %s230
      %p232 = scmp.eq.s32.totalorder %s33, 0
      %p233 = por %p231, %p232
      %s235 = sadd.s32 %s234, 1
      %p238 = scmp.eq.s32.totalorder %s27, 1
      %p239 = scmp.ne.s32.totalorder %s234, %s236
      %p240 = scmp.eq.s32.totalorder %s27, 0
      %p241 = por %p239, %p240
      %p242 = scmp.ne.s32.totalorder %s234, %s236
      %p243 = scmp.eq.s32.totalorder %s32, 1
      %p244 = por %p242, %p243
      %p245 = scmp.ne.s32.totalorder %s236, %s237
      %p246 = scmp.eq.s32.totalorder %s32, 0
      %p247 = por %p245, %p246
      %p248 = scmp.ne.s32.totalorder %s236, %s237
      %p249 = scmp.eq.s32.totalorder %s33, 1
      %p250 = por %p248, %p249
      %p252 = scmp.ne.s32.totalorder %s237, %s251
      %p253 = scmp.eq.s32.totalorder %s33, 0
      %p254 = por %p252, %p253
      %s256 = sadd.s32 %s255, 1
      %p259 = scmp.eq.s32.totalorder %s27, 1
      %p260 = scmp.ne.s32.totalorder %s255, %s257
      %p261 = scmp.eq.s32.totalorder %s27, 0
      %p262 = por %p260, %p261
      %p263 = scmp.ne.s32.totalorder %s255, %s257
      %p264 = scmp.eq.s32.totalorder %s32, 1
      %p265 = por %p263, %p264
      %p266 = scmp.ne.s32.totalorder %s257, %s258
      %p267 = scmp.eq.s32.totalorder %s32, 0
      %p268 = por %p266, %p267
      %p269 = scmp.ne.s32.totalorder %s257, %s258
      %p270 = scmp.eq.s32.totalorder %s33, 1
      %p271 = por %p269, %p270
      %p273 = scmp.ne.s32.totalorder %s258, %s272
      %p274 = scmp.eq.s32.totalorder %s33, 0
      %p275 = por %p273, %p274
      %s277 = sadd.s32 %s276, 1
      %p280 = scmp.eq.s32.totalorder %s27, 1
      %p281 = scmp.ne.s32.totalorder %s276, %s278
      %p282 = scmp.eq.s32.totalorder %s27, 0
      %p283 = por %p281, %p282
      %p284 = scmp.ne.s32.totalorder %s276, %s278
      %p285 = scmp.eq.s32.totalorder %s32, 1
      %p286 = por %p284, %p285
      %p287 = scmp.ne.s32.totalorder %s278, %s279
      %p288 = scmp.eq.s32.totalorder %s32, 0
      %p289 = por %p287, %p288
      %p290 = scmp.ne.s32.totalorder %s278, %s279
      %p291 = scmp.eq.s32.totalorder %s33, 1
      %p292 = por %p290, %p291
      %p294 = scmp.ne.s32.totalorder %s279, %s293
      %p295 = scmp.eq.s32.totalorder %s33, 0
      %p296 = por %p294, %p295
      %s298 = sadd.s32 %s297, 1
      %p301 = scmp.eq.s32.totalorder %s27, 1
      %p302 = scmp.ne.s32.totalorder %s297, %s299
      %p303 = scmp.eq.s32.totalorder %s27, 0
      %p304 = por %p302, %p303
      %p305 = scmp.ne.s32.totalorder %s297, %s299
      %p306 = scmp.eq.s32.totalorder %s32, 1
      %p307 = por %p305, %p306
      %p308 = scmp.ne.s32.totalorder %s299, %s300
      %p309 = scmp.eq.s32.totalorder %s32, 0
      %p310 = por %p308, %p309
      %p311 = scmp.ne.s32.totalorder %s299, %s300
      %p312 = scmp.eq.s32.totalorder %s33, 1
      %p313 = por %p311, %p312
      %p315 = scmp.ne.s32.totalorder %s300, %s314
      %p316 = scmp.eq.s32.totalorder %s33, 0
      %p317 = por %p315, %p316
      %s319 = sadd.s32 %s318, 1
      %p322 = scmp.eq.s32.totalorder %s27, 1
      %p323 = scmp.ne.s32.totalorder %s318, %s320
      %p324 = scmp.eq.s32.totalorder %s27, 0
      %p325 = por %p323, %p324
      %p326 = scmp.ne.s32.totalorder %s318, %s320
      %p327 = scmp.eq.s32.totalorder %s32, 1
      %p328 = por %p326, %p327
      %p329 = scmp.ne.s32.totalorder %s320, %s321
      %p330 = scmp.eq.s32.totalorder %s32, 0
      %p331 = por %p329, %p330
      %p332 = scmp.ne.s32.totalorder %s320, %s321
      %p333 = scmp.eq.s32.totalorder %s33, 1
      %p334 = por %p332, %p333
      %p336 = scmp.ne.s32.totalorder %s321, %s335
      %p337 = scmp.eq.s32.totalorder %s33, 0
      %p338 = por %p336, %p337
      %s340 = sadd.s32 %s339, 1
      %p343 = scmp.eq.s32.totalorder %s27, 1
      %p344 = scmp.ne.s32.totalorder %s339, %s341
      %p345 = scmp.eq.s32.totalorder %s27, 0
      %p346 = por %p344, %p345
      %p347 = scmp.ne.s32.totalorder %s339, %s341
      %p348 = scmp.eq.s32.totalorder %s32, 1
      %p349 = por %p347, %p348
      %p350 = scmp.ne.s32.totalorder %s341, %s342
      %p351 = scmp.eq.s32.totalorder %s32, 0
      %p352 = por %p350, %p351
      %p353 = scmp.ne.s32.totalorder %s341, %s342
      %p354 = scmp.eq.s32.totalorder %s33, 1
      %p355 = por %p353, %p354
      %p357 = scmp.ne.s32.totalorder %s342, %s356
      %p358 = scmp.eq.s32.totalorder %s33, 0
      %p359 = por %p357, %p358
      %s360 = ssub.s32 %s27, %s34
      %p361 = scmp.eq.s32.totalorder %s360, 0
      %s363 = sadd.s32 %s362, 1
      %s364 = scalar_select %p361, %s362, %s363
      %p367 = pneg %p361
      %p368 = scmp.eq.s32.totalorder %s27, 1
      %p369 = por %p367, %p368
      %p370 = scmp.ne.s32.totalorder %s362, %s365
      %p371 = scmp.eq.s32.totalorder %s27, 0
      %p372 = por %p370, %p371
      %p373 = scmp.ne.s32.totalorder %s362, %s365
      %p374 = scmp.eq.s32.totalorder %s32, 1
      %p375 = por %p373, %p374
      %p376 = scmp.ne.s32.totalorder %s365, %s366
      %p377 = scmp.eq.s32.totalorder %s32, 0
      %p378 = por %p376, %p377
      %p379 = scmp.ne.s32.totalorder %s365, %s366
      %p380 = scmp.eq.s32.totalorder %s33, 1
      %p381 = por %p379, %p380
      %p383 = scmp.ne.s32.totalorder %s366, %s382
      %p384 = scmp.eq.s32.totalorder %s33, 0
      %p385 = por %p383, %p384
      %p386 = scmp.le.s32.totalorder 1, %s27
      %p387 = scmp.lt.s32.totalorder %s27, 3
      %p388 = pnand %p386, %p387
      %p389 = pneg %p388
      // Predicated region
      $region9: #{_text_decoder_jit.1} parent=5 // pred_check
        _
      $region10: #{_text_decoder_jit.1} parent=5 // pred_check_branch
        %391 = sbr.rel (%p388) target = $region12
      $region11: #{_text_decoder_jit.1} parent=5 // pred_region
        %s392 = ssub.s32 %s27, 1
        // Predicated region
        $region13: #{_text_decoder_jit.1} parent=11 // pred_check
          %p393 = pneg %p100
        $region14: #{_text_decoder_jit.1} parent=11 // pred_check_branch
          %395 = sbr.rel (%p393) target = $region16
        $region15: #{_text_decoder_jit.1} parent=11 // pred_region
          _
        $region16: #{_text_decoder_jit.1} parent=11 // pred_fallthru
          _
        // Predicated region
        $region17: #{_text_decoder_jit.1} parent=11 // pred_check
          %p396 = pneg %p121
        $region18: #{_text_decoder_jit.1} parent=11 // pred_check_branch
          %398 = sbr.rel (%p396) target = $region20
        $region19: #{_text_decoder_jit.1} parent=11 // pred_region
          %s400 = ssub.s32 6144, 6144
          %401 = vsyncadd [#allocation3], %s400
          %s402 = sshll.u32 [#allocation2], 4
          %s403 = int_to_ptr.vmem [resolvable:$true] %s402
          %408 = dma.hbm_to_vmem [thread:$0]  %s3, 6144, %s403, [#allocation3], 384, 384, 24
        $region20: #{_text_decoder_jit.1} parent=11 // pred_fallthru
          _
        // Predicated region
        $region21: #{_text_decoder_jit.1} parent=11 // pred_check
          %p409 = pneg %p142
        $region22: #{_text_decoder_jit.1} parent=11 // pred_check_branch
          %411 = sbr.rel (%p409) target = $region24
        $region23: #{_text_decoder_jit.1} parent=11 // pred_region
          _
        $region24: #{_text_decoder_jit.1} parent=11 // pred_fallthru
          _
        // Predicated region
        $region25: #{_text_decoder_jit.1} parent=11 // pred_check
          %p412 = pneg %p163
        $region26: #{_text_decoder_jit.1} parent=11 // pred_check_branch
          %414 = sbr.rel (%p412) target = $region28
        $region27: #{_text_decoder_jit.1} parent=11 // pred_region
          %s416 = ssub.s32 2048, 2048
          %417 = vsyncadd [#allocation6], %s416
          %s418 = sshll.u32 [#allocation5], 4
          %s419 = int_to_ptr.vmem [resolvable:$true] %s418
          %424 = dma.hbm_to_vmem [thread:$0]  %s5, 2048, %s419, [#allocation6], 128, 128, 8
        $region28: #{_text_decoder_jit.1} parent=11 // pred_fallthru
          _
        // Predicated region
        $region29: #{_text_decoder_jit.1} parent=11 // pred_check
          %p425 = pneg %p184
        $region30: #{_text_decoder_jit.1} parent=11 // pred_check_branch
          %427 = sbr.rel (%p425) target = $region32
        $region31: #{_text_decoder_jit.1} parent=11 // pred_region
          _
        $region32: #{_text_decoder_jit.1} parent=11 // pred_fallthru
          _
        // Predicated region
        $region33: #{_text_decoder_jit.1} parent=11 // pred_check
          %p428 = pneg %p205
        $region34: #{_text_decoder_jit.1} parent=11 // pred_check_branch
          %430 = sbr.rel (%p428) target = $region36
        $region35: #{_text_decoder_jit.1} parent=11 // pred_region
          _
        $region36: #{_text_decoder_jit.1} parent=11 // pred_fallthru
          _
        // Predicated region
        $region37: #{_text_decoder_jit.1} parent=11 // pred_check
          %p431 = pneg %p226
        $region38: #{_text_decoder_jit.1} parent=11 // pred_check_branch
          %433 = sbr.rel (%p431) target = $region40
        $region39: #{_text_decoder_jit.1} parent=11 // pred_region
          %s435 = ssub.s32 8192, 8192
          %436 = vsyncadd [#allocation6], %s435
          %s437 = sshll.u32 [#allocation7], 4
          %s438 = int_to_ptr.vmem [resolvable:$true] %s437
          %443 = dma.hbm_to_vmem [thread:$0]  %s8, 8192, %s438, [#allocation6], 512, 512, 32
        $region40: #{_text_decoder_jit.1} parent=11 // pred_fallthru
          _
        // Predicated region
        $region41: #{_text_decoder_jit.1} parent=11 // pred_check
          %p444 = pneg %p247
        $region42: #{_text_decoder_jit.1} parent=11 // pred_check_branch
          %446 = sbr.rel (%p444) target = $region44
        $region43: #{_text_decoder_jit.1} parent=11 // pred_region
          _
        $region44: #{_text_decoder_jit.1} parent=11 // pred_fallthru
          _
        // Predicated region
        $region45: #{_text_decoder_jit.1} parent=11 // pred_check
          %p447 = pneg %p268
        $region46: #{_text_decoder_jit.1} parent=11 // pred_check_branch
          %449 = sbr.rel (%p447) target = $region48
        $region47: #{_text_decoder_jit.1} parent=11 // pred_region
          %s451 = ssub.s32 4096, 4096
          %452 = vsyncadd [#allocation9], %s451
          %s453 = sshll.u32 [#allocation8], 4
          %s454 = int_to_ptr.vmem [resolvable:$true] %s453
          %459 = dma.hbm_to_vmem [thread:$0]  %s10, 4096, %s454, [#allocation9], 128, 128, 8
        $region48: #{_text_decoder_jit.1} parent=11 // pred_fallthru
          _
        // Predicated region
        $region49: #{_text_decoder_jit.1} parent=11 // pred_check
          %p460 = pneg %p289
        $region50: #{_text_decoder_jit.1} parent=11 // pred_check_branch
          %462 = sbr.rel (%p460) target = $region52
        $region51: #{_text_decoder_jit.1} parent=11 // pred_region
          _
        $region52: #{_text_decoder_jit.1} parent=11 // pred_fallthru
          _
        // Predicated region
        $region53: #{_text_decoder_jit.1} parent=11 // pred_check
          %p463 = pneg %p310
        $region54: #{_text_decoder_jit.1} parent=11 // pred_check_branch
          %465 = sbr.rel (%p463) target = $region56
        $region55: #{_text_decoder_jit.1} parent=11 // pred_region
          _
        $region56: #{_text_decoder_jit.1} parent=11 // pred_fallthru
          _
        // Predicated region
        $region57: #{_text_decoder_jit.1} parent=11 // pred_check
          %p466 = pneg %p331
        $region58: #{_text_decoder_jit.1} parent=11 // pred_check_branch
          %468 = sbr.rel (%p466) target = $region60
        $region59: #{_text_decoder_jit.1} parent=11 // pred_region
          %s470 = ssub.s32 4096, 4096
          %471 = vsyncadd [#allocation9], %s470
          %s472 = sshll.u32 [#allocation10], 4
          %s473 = int_to_ptr.vmem [resolvable:$true] %s472
          %478 = dma.hbm_to_vmem [thread:$0]  %s13, 4096, %s473, [#allocation9], 256, 256, 16
        $region60: #{_text_decoder_jit.1} parent=11 // pred_fallthru
          _
        // Predicated region
        $region61: #{_text_decoder_jit.1} parent=11 // pred_check
          %p479 = pneg %p352
        $region62: #{_text_decoder_jit.1} parent=11 // pred_check_branch
          %481 = sbr.rel (%p479) target = $region64
        $region63: #{_text_decoder_jit.1} parent=11 // pred_region
          _
        $region64: #{_text_decoder_jit.1} parent=11 // pred_fallthru
          _
      $region12: #{_text_decoder_jit.1} parent=5 // pred_fallthru
        _
      %p482 = scmp.lt.s32.totalorder %s27, 2
      // Predicated region
      $region65: #{_text_decoder_jit.1} parent=5 // pred_check
        %p483 = pneg %p482
      $region66: #{_text_decoder_jit.1} parent=5 // pred_check_branch
        %485 = sbr.rel (%p483) target = $region68
      $region67: #{_text_decoder_jit.1} parent=5 // pred_region
        // Predicated region
        $region69: #{_text_decoder_jit.1} parent=67 // pred_check
          %p486 = pneg %p47
        $region70: #{_text_decoder_jit.1} parent=67 // pred_check_branch
          %488 = sbr.rel (%p486) target = $region72
        $region71: #{_text_decoder_jit.1} parent=67 // pred_region
          %p489 = scmp.lt.s32.totalorder %s27, 1
          %s490 = scalar_select %p489, %s27, 1
          %s491 = smul.addr %s490, 2
          %s492 = smul.addr %s491, 8
          %s493 = scalar_lea.vmem %s0, %s492
        $region72: #{_text_decoder_jit.1} parent=67 // pred_fallthru
          _
        // Predicated region
        $region73: #{_text_decoder_jit.1} parent=67 // pred_check
          %p494 = pneg %p73
        $region74: #{_text_decoder_jit.1} parent=67 // pred_check_branch
          %496 = sbr.rel (%p494) target = $region76
        $region75: #{_text_decoder_jit.1} parent=67 // pred_region
          %p497 = scmp.lt.s32.totalorder %s27, 1
          %s498 = scalar_select %p497, %s27, 1
          %s499 = scalar_lea.vmem %s1, %s498
        $region76: #{_text_decoder_jit.1} parent=67 // pred_fallthru
          _
      $region68: #{_text_decoder_jit.1} parent=5 // pred_fallthru
        _
      %p500 = scmp.le.s32.totalorder 1, %s27
      %p501 = scmp.lt.s32.totalorder %s27, 3
      %p502 = pnand %p500, %p501
      %p503 = pneg %p502
      // Predicated region
      $region77: #{_text_decoder_jit.1} parent=5 // pred_check
        _
      $region78: #{_text_decoder_jit.1} parent=5 // pred_check_branch
        %505 = sbr.rel (%p502) target = $region80
      $region79: #{_text_decoder_jit.1} parent=5 // pred_region
        %s506 = ssub.s32 %s27, 1
        // Predicated region
        $region81: #{_text_decoder_jit.1} parent=79 // pred_check
          %p507 = pneg %p121
        $region82: #{_text_decoder_jit.1} parent=79 // pred_check_branch
          %509 = sbr.rel (%p507) target = $region84
        $region83: #{_text_decoder_jit.1} parent=79 // pred_region
          %510 = dma.done [#allocation3], 6144
        $region84: #{_text_decoder_jit.1} parent=79 // pred_fallthru
          _
        // Predicated region
        $region85: #{_text_decoder_jit.1} parent=79 // pred_check
          %p511 = pneg %p163
        $region86: #{_text_decoder_jit.1} parent=79 // pred_check_branch
          %513 = sbr.rel (%p511) target = $region88
        $region87: #{_text_decoder_jit.1} parent=79 // pred_region
          %514 = dma.done [#allocation6], 2048
        $region88: #{_text_decoder_jit.1} parent=79 // pred_fallthru
          _
        // Predicated region
        $region89: #{_text_decoder_jit.1} parent=79 // pred_check
          %p515 = pneg %p226
        $region90: #{_text_decoder_jit.1} parent=79 // pred_check_branch
          %517 = sbr.rel (%p515) target = $region92
        $region91: #{_text_decoder_jit.1} parent=79 // pred_region
          %518 = dma.done [#allocation6], 8192
        $region92: #{_text_decoder_jit.1} parent=79 // pred_fallthru
          _
        // Predicated region
        $region93: #{_text_decoder_jit.1} parent=79 // pred_check
          %p519 = pneg %p268
        $region94: #{_text_decoder_jit.1} parent=79 // pred_check_branch
          %521 = sbr.rel (%p519) target = $region96
        $region95: #{_text_decoder_jit.1} parent=79 // pred_region
          %522 = dma.done [#allocation9], 4096
        $region96: #{_text_decoder_jit.1} parent=79 // pred_fallthru
          _
        // Predicated region
        $region97: #{_text_decoder_jit.1} parent=79 // pred_check
          %p523 = pneg %p331
        $region98: #{_text_decoder_jit.1} parent=79 // pred_check_branch
          %525 = sbr.rel (%p523) target = $region100
        $region99: #{_text_decoder_jit.1} parent=79 // pred_region
          %526 = dma.done [#allocation9], 4096
        $region100: #{_text_decoder_jit.1} parent=79 // pred_fallthru
          _
        %p527 = scmp.lt.s32.totalorder %s32, 1
        %s528 = scalar_select %p527, %s32, 1
        %s529 = smul.addr %s528, 2
        %s530 = smul.addr %s529, 8
        %s531 = scalar_lea.vmem %s0, %s530
        %p532 = pneg %p53
        %p533 = pneg %p50
        %p534 = scmp.lt.s32.totalorder %s32, 1
        %s535 = scalar_select %p534, %s32, 1
        %s536 = scalar_lea.vmem %s1, %s535
        %p537 = pneg %p79
        %p538 = pneg %p76
        %p539 = pneg %p100
        %p540 = pneg %p97
        %p541 = pneg %p121
        %p542 = pneg %p118
        %p543 = pneg %p142
        %p544 = pneg %p139
        %p545 = pneg %p163
        %p546 = pneg %p160
        %p547 = pneg %p184
        %p548 = pneg %p181
        %p549 = pneg %p205
        %p550 = pneg %p202
        %p551 = pneg %p226
        %p552 = pneg %p223
        %p553 = pneg %p247
        %p554 = pneg %p244
        %p555 = pneg %p268
        %p556 = pneg %p265
        %p557 = pneg %p289
        %p558 = pneg %p286
        %p559 = pneg %p310
        %p560 = pneg %p307
        %p561 = pneg %p331
        %p562 = pneg %p328
        %p563 = pneg %p352
        %p564 = pneg %p349
        %p565 = pneg %p378
        %p566 = pneg %p375
        %s567 = sand.u32 %s365, 1
        %s568 = scalar_lea.sflag [#allocation4], %s567
        %s569 = sand.u32 %s365, 1
        %s570 = smul.addr %s569, 32
        %s571 = scalar_lea.vmem [#allocation11], %s570
        %p572 = scmp.lt.s32.totalorder %s32, 1
        %s573 = scalar_select %p572, %s32, 1
        %s574 = smul.addr %s573, 2
        %s575 = smul.addr %s574, 8
        %s576 = scalar_lea.vmem %s0, %s575
        %p577 = scmp.lt.s32.totalorder %s32, 1
        %s578 = scalar_select %p577, %s32, 1
        %s579 = scalar_lea.vmem %s1, %s578
        %v581 = vld [vmem:[%s576] sm:$0xff]
        %v582 = vld [vmem:[%s576 + $0x8] sm:$0xff]
        %v583 = vld [vmem:[%s579] sm:$0x1]
        %v584 = vmul.f32 %v581, %v581
        %v585 = vmul.f32 %v582, %v582
        %586 = vadd.xlane.f32.xlu0 %v584
        %v587 = vpop.xlane.xlu0 %586
        %588 = vadd.xlane.f32.xlu0 %v585
        %v589 = vpop.xlane.xlu0 %588
        %v590 = vrcp.pop 128.0
        %v591 = vmul.f32 %v587, %v590
        %v592 = vmul.f32 %v589, %v590
        %v593 = vadd.f32 %v591, 1e-06
        %v594 = vadd.f32 %v592, 1e-06
        %v595 = vrsqrt.pop %v593
        %v596 = vrsqrt.pop %v594
        %v597 = vmul.f32 %v581, %v595
        %v598 = vmul.f32 %v582, %v596
        %v599 = vld [vmem:[%s2] sm:$0x1]
        %v601 = vlaneseq
        %v602 = vshrl.u32 %v601, 7
        %v603 = vsub.s32 0, %v602
        %v604 = vrot.slane %v599, %v603
        %v606 = vmul.f32 %v597, %v604
        %v607 = vmul.f32 %v598, %v604
        %v608 = vpack.c.bf16 %v607, %v606
        %v609 = vld [vmem:[#allocation2] sm:$0xff]
        %v610 = vld [vmem:[#allocation2 + $0x8] sm:$0xff]
        %v611 = vld [vmem:[#allocation2 + $0x10] sm:$0xff]
        %v612 = vld [vmem:[#allocation2 + $0x18] sm:$0xff]
        %v613 = vld [vmem:[#allocation2 + $0x20] sm:$0xff]
        %v614 = vld [vmem:[#allocation2 + $0x28] sm:$0xff]
        %v615 = vld [vmem:[#allocation2 + $0x30] sm:$0xff]
        %v616 = vld [vmem:[#allocation2 + $0x38] sm:$0xff]
        %v617 = vld [vmem:[#allocation2 + $0x40] sm:$0xff]
        %v618 = vld [vmem:[#allocation2 + $0x48] sm:$0xff]
        %v619 = vld [vmem:[#allocation2 + $0x50] sm:$0xff]
        %v620 = vld [vmem:[#allocation2 + $0x58] sm:$0xff]
        %v621 = vld [vmem:[#allocation2 + $0x60] sm:$0xff]
        %v622 = vld [vmem:[#allocation2 + $0x68] sm:$0xff]
        %v623 = vld [vmem:[#allocation2 + $0x70] sm:$0xff]
        %v624 = vld [vmem:[#allocation2 + $0x78] sm:$0xff]
        %v625 = vld [vmem:[#allocation2 + $0x80] sm:$0xff]
        %v626 = vld [vmem:[#allocation2 + $0x88] sm:$0xff]
        %v627 = vld [vmem:[#allocation2 + $0x90] sm:$0xff]
        %v628 = vld [vmem:[#allocation2 + $0x98] sm:$0xff]
        %v629 = vld [vmem:[#allocation2 + $0xa0] sm:$0xff]
        %v630 = vld [vmem:[#allocation2 + $0xa8] sm:$0xff]
        %v631 = vld [vmem:[#allocation2 + $0xb0] sm:$0xff]
        %v632 = vld [vmem:[#allocation2 + $0xb8] sm:$0xff]
        %v633 = vld [vmem:[#allocation2 + $0xc0] sm:$0xff]
        %v634 = vld [vmem:[#allocation2 + $0xc8] sm:$0xff]
        %v635 = vld [vmem:[#allocation2 + $0xd0] sm:$0xff]
        %v636 = vld [vmem:[#allocation2 + $0xd8] sm:$0xff]
        %v637 = vld [vmem:[#allocation2 + $0xe0] sm:$0xff]
        %v638 = vld [vmem:[#allocation2 + $0xe8] sm:$0xff]
        %v639 = vld [vmem:[#allocation2 + $0xf0] sm:$0xff]
        %v640 = vld [vmem:[#allocation2 + $0xf8] sm:$0xff]
        %v641 = vld [vmem:[#allocation2 + $0x100] sm:$0xff]
        %v642 = vld [vmem:[#allocation2 + $0x108] sm:$0xff]
        %v643 = vld [vmem:[#allocation2 + $0x110] sm:$0xff]
        %v644 = vld [vmem:[#allocation2 + $0x118] sm:$0xff]
        %v645 = vld [vmem:[#allocation2 + $0x120] sm:$0xff]
        %v646 = vld [vmem:[#allocation2 + $0x128] sm:$0xff]
        %v647 = vld [vmem:[#allocation2 + $0x130] sm:$0xff]
        %v648 = vld [vmem:[#allocation2 + $0x138] sm:$0xff]
        %v649 = vld [vmem:[#allocation2 + $0x140] sm:$0xff]
        %v650 = vld [vmem:[#allocation2 + $0x148] sm:$0xff]
        %v651 = vld [vmem:[#allocation2 + $0x150] sm:$0xff]
        %v652 = vld [vmem:[#allocation2 + $0x158] sm:$0xff]
        %v653 = vld [vmem:[#allocation2 + $0x160] sm:$0xff]
        %v654 = vld [vmem:[#allocation2 + $0x168] sm:$0xff]
        %v655 = vld [vmem:[#allocation2 + $0x170] sm:$0xff]
        %v656 = vld [vmem:[#allocation2 + $0x178] sm:$0xff]
        %v657 = vpack.c.bf16 %v612, %v609
        %v658 = vpack.c.bf16 %v613, %v610
        %v659 = vpack.c.bf16 %v614, %v611
        %v660 = vpack.c.bf16 %v618, %v615
        %v661 = vpack.c.bf16 %v619, %v616
        %v662 = vpack.c.bf16 %v620, %v617
        %v663 = vpack.c.bf16 %v624, %v621
        %v664 = vpack.c.bf16 %v625, %v622
        %v665 = vpack.c.bf16 %v626, %v623
        %v666 = vpack.c.bf16 %v630, %v627
        %v667 = vpack.c.bf16 %v631, %v628
        %v668 = vpack.c.bf16 %v632, %v629
        %v669 = vpack.c.bf16 %v636, %v633
        %v670 = vpack.c.bf16 %v637, %v634
        %v671 = vpack.c.bf16 %v638, %v635
        %v672 = vpack.c.bf16 %v642, %v639
        %v673 = vpack.c.bf16 %v643, %v640
        %v674 = vpack.c.bf16 %v644, %v641
        %v675 = vpack.c.bf16 %v648, %v645
        %v676 = vpack.c.bf16 %v649, %v646
        %v677 = vpack.c.bf16 %v650, %v647
        %v678 = vpack.c.bf16 %v654, %v651
        %v679 = vpack.c.bf16 %v655, %v652
        %v680 = vpack.c.bf16 %v656, %v653
        %v681 = vld [vmem:[%s4] sm:$0x7]
        %v683 = vlaneseq
        %v684 = vshrl.u32 %v683, 7
        %v685 = vsub.s32 0, %v684
        %v686 = vrot.slane %v681, %v685
        %v687 = vlaneseq
        %v688 = vshrl.u32 %v687, 7
        %v689 = vsub.s32 1, %v688
        %v690 = vrot.slane %v681, %v689
        %v691 = vlaneseq
        %v692 = vshrl.u32 %v691, 7
        %v693 = vsub.s32 2, %v692
        %v694 = vrot.slane %v681, %v693
        %698 = vmatprep.subr.bf16.mxu0 %v658
        %699 = vmatpush1.bf16.msra.mxu0 %v657
        %700 = vmatprep.subr.bf16.mxu0 %v661
        %701 = vmatpush1.bf16.msra.mxu0 %v660
        %702 = vmatprep.subr.bf16.mxu0 %v664
        %703 = vmatpush1.bf16.msra.mxu0 %v663
        %704 = vmatprep.subr.bf16.mxu0 %v667
        %705 = vmatpush1.bf16.msra.mxu0 %v666
        %706 = vmatprep.subr.bf16.mxu0 %v670
        %707 = vmatpush1.bf16.msra.mxu0 %v669
        %708 = vmatprep.subr.bf16.mxu0 %v673
        %709 = vmatpush1.bf16.msra.mxu0 %v672
        %710 = vmatprep.subr.bf16.mxu0 %v676
        %711 = vmatpush1.bf16.msra.mxu0 %v675
        %712 = vmatprep.subr.bf16.mxu0 %v679
        %713 = vmatpush1.bf16.msra.mxu0 %v678
        %714 = vmatprep.subr.bf16.mxu0 0
        %715 = vmatpush1.bf16.msra.mxu0 0
        %716 = vmatprep.subr.bf16.mxu0 0
        %717 = vmatpush1.bf16.msra.mxu0 0
        %718 = vmatprep.subr.bf16.mxu0 0
        %719 = vmatpush1.bf16.msra.mxu0 0
        %720 = vmatprep.subr.bf16.mxu0 0
        %721 = vmatpush1.bf16.msra.mxu0 0
        %722 = vmatprep.subr.bf16.mxu0 0
        %723 = vmatpush1.bf16.msra.mxu0 0
        %724 = vmatprep.subr.bf16.mxu0 0
        %725 = vmatpush1.bf16.msra.mxu0 0
        %726 = vmatprep.subr.bf16.mxu0 0
        %727 = vmatpush1.bf16.msra.mxu0 0
        %728 = vmatprep.subr.bf16.mxu0 0
        %729 = vmatpush1.bf16.msra.mxu0 0
        %730 = vmatprep.mubr.bf16.mxu0 0
        %731 = vmatmul.mubr.bf16.gmra.mrb[0].mxu0 %v608
        %v732 = vpop.f32.mrb[0].mxu0
        %v733 = vadd.f32 %v686, %v732
        %v734 = vpop.f32.mrb[0].mxu0
        %v735 = vadd.f32 %v690, %v734
        %v736 = vpop.f32.mrb[0].mxu0
        %v737 = vadd.f32 %v686, %v736
        %v738 = vpop.f32.mrb[0].mxu0
        %v739 = vadd.f32 %v690, %v738
        %740 = vdwg.mxu0
        %741 = vmatprep.subr.bf16.mxu0 0
        %742 = vmatpush1.bf16.msra.mxu0 %v659
        %743 = vmatprep.subr.bf16.mxu0 0
        %744 = vmatpush1.bf16.msra.mxu0 %v662
        %745 = vmatprep.subr.bf16.mxu0 0
        %746 = vmatpush1.bf16.msra.mxu0 %v665
        %747 = vmatprep.subr.bf16.mxu0 0
        %748 = vmatpush1.bf16.msra.mxu0 %v668
        %749 = vmatprep.subr.bf16.mxu0 0
        %750 = vmatpush1.bf16.msra.mxu0 %v671
        %751 = vmatprep.subr.bf16.mxu0 0
        %752 = vmatpush1.bf16.msra.mxu0 %v674
        %753 = vmatprep.subr.bf16.mxu0 0
        %754 = vmatpush1.bf16.msra.mxu0 %v677
        %755 = vmatprep.subr.bf16.mxu0 0
        %756 = vmatpush1.bf16.msra.mxu0 %v680
        %757 = vmatprep.subr.bf16.mxu0 0
        %758 = vmatpush1.bf16.msra.mxu0 0
        %759 = vmatprep.subr.bf16.mxu0 0
        %760 = vmatpush1.bf16.msra.mxu0 0
        %761 = vmatprep.subr.bf16.mxu0 0
        %762 = vmatpush1.bf16.msra.mxu0 0
        %763 = vmatprep.subr.bf16.mxu0 0
        %764 = vmatpush1.bf16.msra.mxu0 0
        %765 = vmatprep.subr.bf16.mxu0 0
        %766 = vmatpush1.bf16.msra.mxu0 0
        %767 = vmatprep.subr.bf16.mxu0 0
        %768 = vmatpush1.bf16.msra.mxu0 0
        %769 = vmatprep.subr.bf16.mxu0 0
        %770 = vmatpush1.bf16.msra.mxu0 0
        %771 = vmatprep.subr.bf16.mxu0 0
        %772 = vmatpush1.bf16.msra.mxu0 0
        %773 = vmatprep.mubr.bf16.mxu0 0
        %774 = vmatmul.mubr.bf16.gmra.mrb[0].mxu0 %v608
        %v775 = vpop.f32.mrb[0].mxu0
        %v776 = vadd.f32 %v694, %v775
        %v777 = vpop.f32.mrb[0].mxu0
        %v778 = vpop.f32.mrb[0].mxu0
        %v779 = vadd.f32 %v694, %v778
        %v780 = vpop.f32.mrb[0].mxu0
        %781 = vdwg.mxu0
        %v782 = vlaneseq
        %v783 = vshrl.u32 %v782, 7
        %v784 = vadd.s32 %v783, 8
        %v785 = vlaneseq
        %v786 = vand.u32 %v785, 127
        %vm787 = vcmp.le.s32.totalorder %v786, %v783
        %vm788 = vcmp.le.s32.totalorder %v786, %v784
        %v789 = vsel %vm787, 0.0, -1e+30
        %v790 = vsel %vm788, 0.0, -1e+30
        %v791 = vpack.c.bf16 %v737, %v733
        %v792 = vpack.c.bf16 %v739, %v735
        %vm793 = vcmask 261120
        %v795 = vsel %vm793, %v791, 0
        %v798 = vsel %vm793, %v792, 0
        %800 = vmatprep.subr.bf16.mxu0 0
        %801 = vmatpush1.bf16.xpose.msra.mxu0 %v798
        %802 = vmatprep.subr.bf16.mxu0 0
        %803 = vmatpush1.bf16.xpose.msra.mxu0 0
        %804 = vmatprep.subr.bf16.mxu0 0
        %805 = vmatpush1.bf16.xpose.msra.mxu0 0
        %806 = vmatprep.subr.bf16.mxu0 0
        %807 = vmatpush1.bf16.xpose.msra.mxu0 0
        %808 = vmatprep.subr.bf16.mxu0 0
        %809 = vmatpush1.bf16.xpose.msra.mxu0 0
        %810 = vmatprep.subr.bf16.mxu0 0
        %811 = vmatpush1.bf16.xpose.msra.mxu0 0
        %812 = vmatprep.subr.bf16.mxu0 0
        %813 = vmatpush1.bf16.xpose.msra.mxu0 0
        %814 = vmatprep.subr.bf16.mxu0 0
        %815 = vmatpush1.bf16.xpose.msra.mxu0 0
        %816 = vmatprep.subr.bf16.mxu0 0
        %817 = vmatpush1.bf16.xpose.msra.mxu0 0
        %818 = vmatprep.subr.bf16.mxu0 0
        %819 = vmatpush1.bf16.xpose.msra.mxu0 0
        %820 = vmatprep.subr.bf16.mxu0 0
        %821 = vmatpush1.bf16.xpose.msra.mxu0 0
        %822 = vmatprep.subr.bf16.mxu0 0
        %823 = vmatpush1.bf16.xpose.msra.mxu0 0
        %824 = vmatprep.subr.bf16.mxu0 0
        %825 = vmatpush1.bf16.xpose.msra.mxu0 0
        %826 = vmatprep.subr.bf16.mxu0 0
        %827 = vmatpush1.bf16.xpose.msra.mxu0 0
        %828 = vmatprep.subr.bf16.mxu0 0
        %829 = vmatpush1.bf16.xpose.msra.mxu0 0
        %830 = vmatprep.subr.bf16.mxu0 0
        %831 = vmatpush1.bf16.xpose.msra.mxu0 0
        %832 = vmatprep.mubr.bf16.mxu0 0
        %833 = vmatmul.mubr.bf16.gmra.mrb[0].mxu0 %v795
        %v834 = vpop.f32.mrb[0].mxu0
        %v835 = vadd.f32 0.0, %v834
        %v836 = vpop.f32.mrb[0].mxu0
        %v837 = vpop.f32.mrb[0].mxu0
        %v838 = vadd.f32 0.0, %v837
        %v839 = vpop.f32.mrb[0].mxu0
        %840 = vdwg.mxu0
        %v841 = vmul.f32 %v835, 0.17677669
        %v842 = vmul.f32 %v838, 0.17677669
        %v843 = vadd.f32 %v841, %v789
        %v844 = vadd.f32 %v842, %v790
        %v846 = vlaneseq
        %v847 = vshrl.u32 %v846, 7
        %v848 = vsub.s32 0, %v847
        %v849 = vrot.slane %v583, %v848
        %v851 = vadd.f32 %v843, %v849
        %v852 = vadd.f32 %v844, %v849
        %vm853 = vcmask 130048
        %v854 = vsel %vm853, %v851, -inf
        %855 = vmax.xlane.f32.xlu0 %v854
        %v856 = vpop.xlane.xlu0 %855
        %v857 = vsel %vm853, %v852, -inf
        %858 = vmax.xlane.f32.xlu0 %v857
        %v859 = vpop.xlane.xlu0 %858
        %v860 = vsub.f32 %v851, %v856
        %v861 = vsub.f32 %v852, %v859
        %v862 = vmul.f32 %v860, 1.442695
        %v863 = vpow.pop %v862
        %v864 = vmul.f32 %v861, 1.442695
        %v865 = vpow.pop %v864
        %v866 = vsel %vm853, %v863, 0.0
        %867 = vadd.xlane.f32.xlu0 %v866
        %v868 = vpop.xlane.xlu0 %867
        %v869 = vsel %vm853, %v865, 0.0
        %870 = vadd.xlane.f32.xlu0 %v869
        %v871 = vpop.xlane.xlu0 %870
        %v872 = vrcp.pop %v868
        %v873 = vrcp.pop %v871
        %v874 = vmul.f32 %v863, %v872
        %v875 = vmul.f32 %v865, %v873
        %v876 = vpack.c.bf16 %v875, %v874
        %v877 = vpack.c.bf16 %v779, %v776
        %v879 = vsel %vm853, %v876, 0
        %881 = vmatprep.subr.bf16.mxu0 0
        %882 = vmatpush1.bf16.msra.mxu0 %v877
        %883 = vmatprep.subr.bf16.mxu0 0
        %884 = vmatpush1.bf16.msra.mxu0 0
        %885 = vmatprep.subr.bf16.mxu0 0
        %886 = vmatpush1.bf16.msra.mxu0 0
        %887 = vmatprep.subr.bf16.mxu0 0
        %888 = vmatpush1.bf16.msra.mxu0 0
        %889 = vmatprep.subr.bf16.mxu0 0
        %890 = vmatpush1.bf16.msra.mxu0 0
        %891 = vmatprep.subr.bf16.mxu0 0
        %892 = vmatpush1.bf16.msra.mxu0 0
        %893 = vmatprep.subr.bf16.mxu0 0
        %894 = vmatpush1.bf16.msra.mxu0 0
        %895 = vmatprep.subr.bf16.mxu0 0
        %896 = vmatpush1.bf16.msra.mxu0 0
        %897 = vmatprep.subr.bf16.mxu0 0
        %898 = vmatpush1.bf16.msra.mxu0 0
        %899 = vmatprep.subr.bf16.mxu0 0
        %900 = vmatpush1.bf16.msra.mxu0 0
        %901 = vmatprep.subr.bf16.mxu0 0
        %902 = vmatpush1.bf16.msra.mxu0 0
        %903 = vmatprep.subr.bf16.mxu0 0
        %904 = vmatpush1.bf16.msra.mxu0 0
        %905 = vmatprep.subr.bf16.mxu0 0
        %906 = vmatpush1.bf16.msra.mxu0 0
        %907 = vmatprep.subr.bf16.mxu0 0
        %908 = vmatpush1.bf16.msra.mxu0 0
        %909 = vmatprep.subr.bf16.mxu0 0
        %910 = vmatpush1.bf16.msra.mxu0 0
        %911 = vmatprep.subr.bf16.mxu0 0
        %912 = vmatpush1.bf16.msra.mxu0 0
        %913 = vmatprep.mubr.bf16.mxu0 0
        %914 = vmatmul.mubr.bf16.gmra.mrb[0].mxu0 %v879
        %v915 = vpop.f32.mrb[0].mxu0
        %v916 = vadd.f32 0.0, %v915
        %v917 = vpop.f32.mrb[0].mxu0
        %v918 = vpop.f32.mrb[0].mxu0
        %v919 = vadd.f32 0.0, %v918
        %v920 = vpop.f32.mrb[0].mxu0
        %921 = vdwg.mxu0
        %923 = vrot.lane.b32.xlu0 %v791, 96
        %v924 = vpop.permute.xlu0 %923
        %926 = vrot.lane.b32.xlu0 %v792, 96
        %v927 = vpop.permute.xlu0 %926
        %v929 = vsel %vm793, %v924, 0
        %v932 = vsel %vm793, %v927, 0
        %934 = vmatprep.subr.bf16.mxu0 0
        %935 = vmatpush1.bf16.xpose.msra.mxu0 %v932
        %936 = vmatprep.subr.bf16.mxu0 0
        %937 = vmatpush1.bf16.xpose.msra.mxu0 0
        %938 = vmatprep.subr.bf16.mxu0 0
        %939 = vmatpush1.bf16.xpose.msra.mxu0 0
        %940 = vmatprep.subr.bf16.mxu0 0
        %941 = vmatpush1.bf16.xpose.msra.mxu0 0
        %942 = vmatprep.subr.bf16.mxu0 0
        %943 = vmatpush1.bf16.xpose.msra.mxu0 0
        %944 = vmatprep.subr.bf16.mxu0 0
        %945 = vmatpush1.bf16.xpose.msra.mxu0 0
        %946 = vmatprep.subr.bf16.mxu0 0
        %947 = vmatpush1.bf16.xpose.msra.mxu0 0
        %948 = vmatprep.subr.bf16.mxu0 0
        %949 = vmatpush1.bf16.xpose.msra.mxu0 0
        %950 = vmatprep.subr.bf16.mxu0 0
        %951 = vmatpush1.bf16.xpose.msra.mxu0 0
        %952 = vmatprep.subr.bf16.mxu0 0
        %953 = vmatpush1.bf16.xpose.msra.mxu0 0
        %954 = vmatprep.subr.bf16.mxu0 0
        %955 = vmatpush1.bf16.xpose.msra.mxu0 0
        %956 = vmatprep.subr.bf16.mxu0 0
        %957 = vmatpush1.bf16.xpose.msra.mxu0 0
        %958 = vmatprep.subr.bf16.mxu0 0
        %959 = vmatpush1.bf16.xpose.msra.mxu0 0
        %960 = vmatprep.subr.bf16.mxu0 0
        %961 = vmatpush1.bf16.xpose.msra.mxu0 0
        %962 = vmatprep.subr.bf16.mxu0 0
        %963 = vmatpush1.bf16.xpose.msra.mxu0 0
        %964 = vmatprep.subr.bf16.mxu0 0
        %965 = vmatpush1.bf16.xpose.msra.mxu0 0
        %966 = vmatprep.mubr.bf16.mxu0 0
        %967 = vmatmul.mubr.bf16.gmra.mrb[0].mxu0 %v929
        %v968 = vpop.f32.mrb[0].mxu0
        %v969 = vadd.f32 0.0, %v968
        %v970 = vpop.f32.mrb[0].mxu0
        %v971 = vpop.f32.mrb[0].mxu0
        %v972 = vadd.f32 0.0, %v971
        %v973 = vpop.f32.mrb[0].mxu0
        %974 = vdwg.mxu0
        %v975 = vmul.f32 %v969, 0.17677669
        %v976 = vmul.f32 %v972, 0.17677669
        %v977 = vadd.f32 %v975, %v789
        %v978 = vadd.f32 %v976, %v790
        %v979 = vadd.f32 %v977, %v849
        %v980 = vadd.f32 %v978, %v849
        %v981 = vsel %vm853, %v979, -inf
        %982 = vmax.xlane.f32.xlu0 %v981
        %v983 = vpop.xlane.xlu0 %982
        %v984 = vsel %vm853, %v980, -inf
        %985 = vmax.xlane.f32.xlu0 %v984
        %v986 = vpop.xlane.xlu0 %985
        %v987 = vsub.f32 %v979, %v983
        %v988 = vsub.f32 %v980, %v986
        %v989 = vmul.f32 %v987, 1.442695
        %v990 = vpow.pop %v989
        %v991 = vmul.f32 %v988, 1.442695
        %v992 = vpow.pop %v991
        %v993 = vsel %vm853, %v990, 0.0
        %994 = vadd.xlane.f32.xlu0 %v993
        %v995 = vpop.xlane.xlu0 %994
        %v996 = vsel %vm853, %v992, 0.0
        %997 = vadd.xlane.f32.xlu0 %v996
        %v998 = vpop.xlane.xlu0 %997
        %v999 = vrcp.pop %v995
        %v1000 = vrcp.pop %v998
        %v1001 = vmul.f32 %v990, %v999
        %v1002 = vmul.f32 %v992, %v1000
        %v1003 = vpack.c.bf16 %v1002, %v1001
        %1005 = vrot.lane.b32.xlu0 %v877, 96
        %v1006 = vpop.permute.xlu0 %1005
        %v1009 = vsel %vm853, %v1003, 0
        %1011 = vmatprep.subr.bf16.mxu0 0
        %1012 = vmatpush1.bf16.msra.mxu0 %v1006
        %1013 = vmatprep.subr.bf16.mxu0 0
        %1014 = vmatpush1.bf16.msra.mxu0 0
        %1015 = vmatprep.subr.bf16.mxu0 0
        %1016 = vmatpush1.bf16.msra.mxu0 0
        %1017 = vmatprep.subr.bf16.mxu0 0
        %1018 = vmatpush1.bf16.msra.mxu0 0
        %1019 = vmatprep.subr.bf16.mxu0 0
        %1020 = vmatpush1.bf16.msra.mxu0 0
        %1021 = vmatprep.subr.bf16.mxu0 0
        %1022 = vmatpush1.bf16.msra.mxu0 0
        %1023 = vmatprep.subr.bf16.mxu0 0
        %1024 = vmatpush1.bf16.msra.mxu0 0
        %1025 = vmatprep.subr.bf16.mxu0 0
        %1026 = vmatpush1.bf16.msra.mxu0 0
        %1027 = vmatprep.subr.bf16.mxu0 0
        %1028 = vmatpush1.bf16.msra.mxu0 0
        %1029 = vmatprep.subr.bf16.mxu0 0
        %1030 = vmatpush1.bf16.msra.mxu0 0
        %1031 = vmatprep.subr.bf16.mxu0 0
        %1032 = vmatpush1.bf16.msra.mxu0 0
        %1033 = vmatprep.subr.bf16.mxu0 0
        %1034 = vmatpush1.bf16.msra.mxu0 0
        %1035 = vmatprep.subr.bf16.mxu0 0
        %1036 = vmatpush1.bf16.msra.mxu0 0
        %1037 = vmatprep.subr.bf16.mxu0 0
        %1038 = vmatpush1.bf16.msra.mxu0 0
        %1039 = vmatprep.subr.bf16.mxu0 0
        %1040 = vmatpush1.bf16.msra.mxu0 0
        %1041 = vmatprep.subr.bf16.mxu0 0
        %1042 = vmatpush1.bf16.msra.mxu0 0
        %1043 = vmatprep.mubr.bf16.mxu0 0
        %1044 = vmatmul.mubr.bf16.gmra.mrb[0].mxu0 %v1009
        %v1045 = vpop.f32.mrb[0].mxu0
        %v1046 = vadd.f32 0.0, %v1045
        %v1047 = vpop.f32.mrb[0].mxu0
        %v1048 = vpop.f32.mrb[0].mxu0
        %v1049 = vadd.f32 0.0, %v1048
        %v1050 = vpop.f32.mrb[0].mxu0
        %1051 = vdwg.mxu0
        %1052 = vrot.lane.b32.xlu0 %v791, 64
        %v1053 = vpop.permute.xlu0 %1052
        %1054 = vrot.lane.b32.xlu0 %v792, 64
        %v1055 = vpop.permute.xlu0 %1054
        %v1057 = vsel %vm793, %v1053, 0
        %v1060 = vsel %vm793, %v1055, 0
        %1062 = vmatprep.subr.bf16.mxu0 0
        %1063 = vmatpush1.bf16.xpose.msra.mxu0 %v1060
        %1064 = vmatprep.subr.bf16.mxu0 0
        %1065 = vmatpush1.bf16.xpose.msra.mxu0 0
        %1066 = vmatprep.subr.bf16.mxu0 0
        %1067 = vmatpush1.bf16.xpose.msra.mxu0 0
        %1068 = vmatprep.subr.bf16.mxu0 0
        %1069 = vmatpush1.bf16.xpose.msra.mxu0 0
        %1070 = vmatprep.subr.bf16.mxu0 0
        %1071 = vmatpush1.bf16.xpose.msra.mxu0 0
        %1072 = vmatprep.subr.bf16.mxu0 0
        %1073 = vmatpush1.bf16.xpose.msra.mxu0 0
        %1074 = vmatprep.subr.bf16.mxu0 0
        %1075 = vmatpush1.bf16.xpose.msra.mxu0 0
        %1076 = vmatprep.subr.bf16.mxu0 0
        %1077 = vmatpush1.bf16.xpose.msra.mxu0 0
        %1078 = vmatprep.subr.bf16.mxu0 0
        %1079 = vmatpush1.bf16.xpose.msra.mxu0 0
        %1080 = vmatprep.subr.bf16.mxu0 0
        %1081 = vmatpush1.bf16.xpose.msra.mxu0 0
        %1082 = vmatprep.subr.bf16.mxu0 0
        %1083 = vmatpush1.bf16.xpose.msra.mxu0 0
        %1084 = vmatprep.subr.bf16.mxu0 0
        %1085 = vmatpush1.bf16.xpose.msra.mxu0 0
        %1086 = vmatprep.subr.bf16.mxu0 0
        %1087 = vmatpush1.bf16.xpose.msra.mxu0 0
        %1088 = vmatprep.subr.bf16.mxu0 0
        %1089 = vmatpush1.bf16.xpose.msra.mxu0 0
        %1090 = vmatprep.subr.bf16.mxu0 0
        %1091 = vmatpush1.bf16.xpose.msra.mxu0 0
        %1092 = vmatprep.subr.bf16.mxu0 0
        %1093 = vmatpush1.bf16.xpose.msra.mxu0 0
        %1094 = vmatprep.mubr.bf16.mxu0 0
        %1095 = vmatmul.mubr.bf16.gmra.mrb[0].mxu0 %v1057
        %v1096 = vpop.f32.mrb[0].mxu0
        %v1097 = vadd.f32 0.0, %v1096
        %v1098 = vpop.f32.mrb[0].mxu0
        %v1099 = vpop.f32.mrb[0].mxu0
        %v1100 = vadd.f32 0.0, %v1099
        %v1101 = vpop.f32.mrb[0].mxu0
        %1102 = vdwg.mxu0
        %v1103 = vmul.f32 %v1097, 0.17677669
        %v1104 = vmul.f32 %v1100, 0.17677669
        %v1105 = vadd.f32 %v1103, %v789
        %v1106 = vadd.f32 %v1104, %v790
        %v1107 = vadd.f32 %v1105, %v849
        %v1108 = vadd.f32 %v1106, %v849
        %v1109 = vsel %vm853, %v1107, -inf
        %1110 = vmax.xlane.f32.xlu0 %v1109
        %v1111 = vpop.xlane.xlu0 %1110
        %v1112 = vsel %vm853, %v1108, -inf
        %1113 = vmax.xlane.f32.xlu0 %v1112
        %v1114 = vpop.xlane.xlu0 %1113
        %v1115 = vsub.f32 %v1107, %v1111
        %v1116 = vsub.f32 %v1108, %v1114
        %v1117 = vmul.f32 %v1115, 1.442695
        %v1118 = vpow.pop %v1117
        %v1119 = vmul.f32 %v1116, 1.442695
        %v1120 = vpow.pop %v1119
        %v1121 = vsel %vm853, %v1118, 0.0
        %1122 = vadd.xlane.f32.xlu0 %v1121
        %v1123 = vpop.xlane.xlu0 %1122
        %v1124 = vsel %vm853, %v1120, 0.0
        %1125 = vadd.xlane.f32.xlu0 %v1124
        %v1126 = vpop.xlane.xlu0 %1125
        %v1127 = vrcp.pop %v1123
        %v1128 = vrcp.pop %v1126
        %v1129 = vmul.f32 %v1118, %v1127
        %v1130 = vmul.f32 %v1120, %v1128
        %v1131 = vpack.c.bf16 %v1130, %v1129
        %1132 = vrot.lane.b32.xlu0 %v877, 64
        %v1133 = vpop.permute.xlu0 %1132
        %v1136 = vsel %vm853, %v1131, 0
        %1138 = vmatprep.subr.bf16.mxu0 0
        %1139 = vmatpush1.bf16.msra.mxu0 %v1133
        %1140 = vmatprep.subr.bf16.mxu0 0
        %1141 = vmatpush1.bf16.msra.mxu0 0
        %1142 = vmatprep.subr.bf16.mxu0 0
        %1143 = vmatpush1.bf16.msra.mxu0 0
        %1144 = vmatprep.subr.bf16.mxu0 0
        %1145 = vmatpush1.bf16.msra.mxu0 0
        %1146 = vmatprep.subr.bf16.mxu0 0
        %1147 = vmatpush1.bf16.msra.mxu0 0
        %1148 = vmatprep.subr.bf16.mxu0 0
        %1149 = vmatpush1.bf16.msra.mxu0 0
        %1150 = vmatprep.subr.bf16.mxu0 0
        %1151 = vmatpush1.bf16.msra.mxu0 0
        %1152 = vmatprep.subr.bf16.mxu0 0
        %1153 = vmatpush1.bf16.msra.mxu0 0
        %1154 = vmatprep.subr.bf16.mxu0 0
        %1155 = vmatpush1.bf16.msra.mxu0 0
        %1156 = vmatprep.subr.bf16.mxu0 0
        %1157 = vmatpush1.bf16.msra.mxu0 0
        %1158 = vmatprep.subr.bf16.mxu0 0
        %1159 = vmatpush1.bf16.msra.mxu0 0
        %1160 = vmatprep.subr.bf16.mxu0 0
        %1161 = vmatpush1.bf16.msra.mxu0 0
        %1162 = vmatprep.subr.bf16.mxu0 0
        %1163 = vmatpush1.bf16.msra.mxu0 0
        %1164 = vmatprep.subr.bf16.mxu0 0
        %1165 = vmatpush1.bf16.msra.mxu0 0
        %1166 = vmatprep.subr.bf16.mxu0 0
        %1167 = vmatpush1.bf16.msra.mxu0 0
        %1168 = vmatprep.subr.bf16.mxu0 0
        %1169 = vmatpush1.bf16.msra.mxu0 0
        %1170 = vmatprep.mubr.bf16.mxu0 0
        %1171 = vmatmul.mubr.bf16.gmra.mrb[0].mxu0 %v1136
        %v1172 = vpop.f32.mrb[0].mxu0
        %v1173 = vadd.f32 0.0, %v1172
        %v1174 = vpop.f32.mrb[0].mxu0
        %v1175 = vpop.f32.mrb[0].mxu0
        %v1176 = vadd.f32 0.0, %v1175
        %v1177 = vpop.f32.mrb[0].mxu0
        %1178 = vdwg.mxu0
        %1179 = vrot.lane.b32.xlu0 %v791, 32
        %v1180 = vpop.permute.xlu0 %1179
        %1181 = vrot.lane.b32.xlu0 %v792, 32
        %v1182 = vpop.permute.xlu0 %1181
        %v1184 = vsel %vm793, %v1180, 0
        %v1187 = vsel %vm793, %v1182, 0
        %1189 = vmatprep.subr.bf16.mxu0 0
        %1190 = vmatpush1.bf16.xpose.msra.mxu0 %v1187
        %1191 = vmatprep.subr.bf16.mxu0 0
        %1192 = vmatpush1.bf16.xpose.msra.mxu0 0
        %1193 = vmatprep.subr.bf16.mxu0 0
        %1194 = vmatpush1.bf16.xpose.msra.mxu0 0
        %1195 = vmatprep.subr.bf16.mxu0 0
        %1196 = vmatpush1.bf16.xpose.msra.mxu0 0
        %1197 = vmatprep.subr.bf16.mxu0 0
        %1198 = vmatpush1.bf16.xpose.msra.mxu0 0
        %1199 = vmatprep.subr.bf16.mxu0 0
        %1200 = vmatpush1.bf16.xpose.msra.mxu0 0
        %1201 = vmatprep.subr.bf16.mxu0 0
        %1202 = vmatpush1.bf16.xpose.msra.mxu0 0
        %1203 = vmatprep.subr.bf16.mxu0 0
        %1204 = vmatpush1.bf16.xpose.msra.mxu0 0
        %1205 = vmatprep.subr.bf16.mxu0 0
        %1206 = vmatpush1.bf16.xpose.msra.mxu0 0
        %1207 = vmatprep.subr.bf16.mxu0 0
        %1208 = vmatpush1.bf16.xpose.msra.mxu0 0
        %1209 = vmatprep.subr.bf16.mxu0 0
        %1210 = vmatpush1.bf16.xpose.msra.mxu0 0
        %1211 = vmatprep.subr.bf16.mxu0 0
        %1212 = vmatpush1.bf16.xpose.msra.mxu0 0
        %1213 = vmatprep.subr.bf16.mxu0 0
        %1214 = vmatpush1.bf16.xpose.msra.mxu0 0
        %1215 = vmatprep.subr.bf16.mxu0 0
        %1216 = vmatpush1.bf16.xpose.msra.mxu0 0
        %1217 = vmatprep.subr.bf16.mxu0 0
        %1218 = vmatpush1.bf16.xpose.msra.mxu0 0
        %1219 = vmatprep.subr.bf16.mxu0 0
        %1220 = vmatpush1.bf16.xpose.msra.mxu0 0
        %1221 = vmatprep.mubr.bf16.mxu0 0
        %1222 = vmatmul.mubr.bf16.gmra.mrb[0].mxu0 %v1184
        %v1223 = vpop.f32.mrb[0].mxu0
        %v1224 = vadd.f32 0.0, %v1223
        %v1225 = vpop.f32.mrb[0].mxu0
        %v1226 = vpop.f32.mrb[0].mxu0
        %v1227 = vadd.f32 0.0, %v1226
        %v1228 = vpop.f32.mrb[0].mxu0
        %1229 = vdwg.mxu0
        %v1230 = vmul.f32 %v1224, 0.17677669
        %v1231 = vmul.f32 %v1227, 0.17677669
        %v1232 = vadd.f32 %v1230, %v789
        %v1233 = vadd.f32 %v1231, %v790
        %v1234 = vadd.f32 %v1232, %v849
        %v1235 = vadd.f32 %v1233, %v849
        %v1236 = vsel %vm853, %v1234, -inf
        %1237 = vmax.xlane.f32.xlu0 %v1236
        %v1238 = vpop.xlane.xlu0 %1237
        %v1239 = vsel %vm853, %v1235, -inf
        %1240 = vmax.xlane.f32.xlu0 %v1239
        %v1241 = vpop.xlane.xlu0 %1240
        %v1242 = vsub.f32 %v1234, %v1238
        %v1243 = vsub.f32 %v1235, %v1241
        %v1244 = vmul.f32 %v1242, 1.442695
        %v1245 = vpow.pop %v1244
        %v1246 = vmul.f32 %v1243, 1.442695
        %v1247 = vpow.pop %v1246
        %v1248 = vsel %vm853, %v1245, 0.0
        %1249 = vadd.xlane.f32.xlu0 %v1248
        %v1250 = vpop.xlane.xlu0 %1249
        %v1251 = vsel %vm853, %v1247, 0.0
        %1252 = vadd.xlane.f32.xlu0 %v1251
        %v1253 = vpop.xlane.xlu0 %1252
        %v1254 = vrcp.pop %v1250
        %v1255 = vrcp.pop %v1253
        %v1256 = vmul.f32 %v1245, %v1254
        %v1257 = vmul.f32 %v1247, %v1255
        %v1258 = vpack.c.bf16 %v1257, %v1256
        %1259 = vrot.lane.b32.xlu0 %v877, 32
        %v1260 = vpop.permute.xlu0 %1259
        %v1263 = vsel %vm853, %v1258, 0
        %1265 = vmatprep.subr.bf16.mxu0 0
        %1266 = vmatpush1.bf16.msra.mxu0 %v1260
        %1267 = vmatprep.subr.bf16.mxu0 0
        %1268 = vmatpush1.bf16.msra.mxu0 0
        %1269 = vmatprep.subr.bf16.mxu0 0
        %1270 = vmatpush1.bf16.msra.mxu0 0
        %1271 = vmatprep.subr.bf16.mxu0 0
        %1272 = vmatpush1.bf16.msra.mxu0 0
        %1273 = vmatprep.subr.bf16.mxu0 0
        %1274 = vmatpush1.bf16.msra.mxu0 0
        %1275 = vmatprep.subr.bf16.mxu0 0
        %1276 = vmatpush1.bf16.msra.mxu0 0
        %1277 = vmatprep.subr.bf16.mxu0 0
        %1278 = vmatpush1.bf16.msra.mxu0 0
        %1279 = vmatprep.subr.bf16.mxu0 0
        %1280 = vmatpush1.bf16.msra.mxu0 0
        %1281 = vmatprep.subr.bf16.mxu0 0
        %1282 = vmatpush1.bf16.msra.mxu0 0
        %1283 = vmatprep.subr.bf16.mxu0 0
        %1284 = vmatpush1.bf16.msra.mxu0 0
        %1285 = vmatprep.subr.bf16.mxu0 0
        %1286 = vmatpush1.bf16.msra.mxu0 0
        %1287 = vmatprep.subr.bf16.mxu0 0
        %1288 = vmatpush1.bf16.msra.mxu0 0
        %1289 = vmatprep.subr.bf16.mxu0 0
        %1290 = vmatpush1.bf16.msra.mxu0 0
        %1291 = vmatprep.subr.bf16.mxu0 0
        %1292 = vmatpush1.bf16.msra.mxu0 0
        %1293 = vmatprep.subr.bf16.mxu0 0
        %1294 = vmatpush1.bf16.msra.mxu0 0
        %1295 = vmatprep.subr.bf16.mxu0 0
        %1296 = vmatpush1.bf16.msra.mxu0 0
        %1297 = vmatprep.mubr.bf16.mxu0 0
        %1298 = vmatmul.mubr.bf16.gmra.mrb[0].mxu0 %v1263
        %v1299 = vpop.f32.mrb[0].mxu0
        %v1300 = vadd.f32 0.0, %v1299
        %v1301 = vpop.f32.mrb[0].mxu0
        %v1302 = vpop.f32.mrb[0].mxu0
        %v1303 = vadd.f32 0.0, %v1302
        %v1304 = vpop.f32.mrb[0].mxu0
        %1305 = vdwg.mxu0
        %1308 = vrot.lane.b32.xlu0 %v1046, 32
        %v1309 = vpop.permute.xlu0 %1308
        %1310 = vrot.lane.b32.xlu0 %v1049, 32
        %v1311 = vpop.permute.xlu0 %1310
        %1316 = vrot.lane.b32.xlu0 %v1173, 64
        %v1317 = vpop.permute.xlu0 %1316
        %1318 = vrot.lane.b32.xlu0 %v1176, 64
        %v1319 = vpop.permute.xlu0 %1318
        %1324 = vrot.lane.b32.xlu0 %v1300, 96
        %v1325 = vpop.permute.xlu0 %1324
        %1326 = vrot.lane.b32.xlu0 %v1303, 96
        %v1327 = vpop.permute.xlu0 %1326
        %v1330 = vsel %vm793, %v916, %v1309
        %v1331 = vsel %vm793, %v919, %v1311
        %vm1332 = vcmask 523264
        %v1333 = vsel %vm1332, %v1330, %v1317
        %v1334 = vsel %vm1332, %v1331, %v1319
        %vm1335 = vcmask 785408
        %v1336 = vsel %vm1335, %v1333, %v1325
        %v1337 = vsel %vm1335, %v1334, %v1327
        %v1338 = vpack.c.bf16 %v1337, %v1336
        %v1339 = vld [vmem:[#allocation5] sm:$0xff]
        %v1340 = vld [vmem:[#allocation5 + $0x8] sm:$0xff]
        %v1341 = vld [vmem:[#allocation5 + $0x10] sm:$0xff]
        %v1342 = vld [vmem:[#allocation5 + $0x18] sm:$0xff]
        %v1343 = vld [vmem:[#allocation5 + $0x20] sm:$0xff]
        %v1344 = vld [vmem:[#allocation5 + $0x28] sm:$0xff]
        %v1345 = vld [vmem:[#allocation5 + $0x30] sm:$0xff]
        %v1346 = vld [vmem:[#allocation5 + $0x38] sm:$0xff]
        %v1347 = vld [vmem:[#allocation5 + $0x40] sm:$0xff]
        %v1348 = vld [vmem:[#allocation5 + $0x48] sm:$0xff]
        %v1349 = vld [vmem:[#allocation5 + $0x50] sm:$0xff]
        %v1350 = vld [vmem:[#allocation5 + $0x58] sm:$0xff]
        %v1351 = vld [vmem:[#allocation5 + $0x60] sm:$0xff]
        %v1352 = vld [vmem:[#allocation5 + $0x68] sm:$0xff]
        %v1353 = vld [vmem:[#allocation5 + $0x70] sm:$0xff]
        %v1354 = vld [vmem:[#allocation5 + $0x78] sm:$0xff]
        %v1355 = vpack.c.bf16 %v1340, %v1339
        %v1356 = vpack.c.bf16 %v1342, %v1341
        %v1357 = vpack.c.bf16 %v1344, %v1343
        %v1358 = vpack.c.bf16 %v1346, %v1345
        %v1359 = vpack.c.bf16 %v1348, %v1347
        %v1360 = vpack.c.bf16 %v1350, %v1349
        %v1361 = vpack.c.bf16 %v1352, %v1351
        %v1362 = vpack.c.bf16 %v1354, %v1353
        %v1363 = vld [vmem:[%s6] sm:$0x1]
        %v1365 = vlaneseq
        %v1366 = vshrl.u32 %v1365, 7
        %v1367 = vsub.s32 0, %v1366
        %v1368 = vrot.slane %v1363, %v1367
        %1370 = vmatprep.subr.bf16.mxu0 0
        %1371 = vmatpush1.bf16.msra.mxu0 %v1355
        %1372 = vmatprep.subr.bf16.mxu0 0
        %1373 = vmatpush1.bf16.msra.mxu0 %v1356
        %1374 = vmatprep.subr.bf16.mxu0 0
        %1375 = vmatpush1.bf16.msra.mxu0 %v1357
        %1376 = vmatprep.subr.bf16.mxu0 0
        %1377 = vmatpush1.bf16.msra.mxu0 %v1358
        %1378 = vmatprep.subr.bf16.mxu0 0
        %1379 = vmatpush1.bf16.msra.mxu0 %v1359
        %1380 = vmatprep.subr.bf16.mxu0 0
        %1381 = vmatpush1.bf16.msra.mxu0 %v1360
        %1382 = vmatprep.subr.bf16.mxu0 0
        %1383 = vmatpush1.bf16.msra.mxu0 %v1361
        %1384 = vmatprep.subr.bf16.mxu0 0
        %1385 = vmatpush1.bf16.msra.mxu0 %v1362
        %1386 = vmatprep.subr.bf16.mxu0 0
        %1387 = vmatpush1.bf16.msra.mxu0 0
        %1388 = vmatprep.subr.bf16.mxu0 0
        %1389 = vmatpush1.bf16.msra.mxu0 0
        %1390 = vmatprep.subr.bf16.mxu0 0
        %1391 = vmatpush1.bf16.msra.mxu0 0
        %1392 = vmatprep.subr.bf16.mxu0 0
        %1393 = vmatpush1.bf16.msra.mxu0 0
        %1394 = vmatprep.subr.bf16.mxu0 0
        %1395 = vmatpush1.bf16.msra.mxu0 0
        %1396 = vmatprep.subr.bf16.mxu0 0
        %1397 = vmatpush1.bf16.msra.mxu0 0
        %1398 = vmatprep.subr.bf16.mxu0 0
        %1399 = vmatpush1.bf16.msra.mxu0 0
        %1400 = vmatprep.subr.bf16.mxu0 0
        %1401 = vmatpush1.bf16.msra.mxu0 0
        %1402 = vmatprep.mubr.bf16.mxu0 0
        %1403 = vmatmul.mubr.bf16.gmra.mrb[0].mxu0 %v1338
        %v1404 = vpop.f32.mrb[0].mxu0
        %v1405 = vadd.f32 %v1368, %v1404
        %v1406 = vpop.f32.mrb[0].mxu0
        %v1407 = vpop.f32.mrb[0].mxu0
        %v1408 = vadd.f32 %v1368, %v1407
        %v1409 = vpop.f32.mrb[0].mxu0
        %1410 = vdwg.mxu0
        %v1411 = vadd.f32 %v581, %v1405
        %v1412 = vadd.f32 %v582, %v1408
        %v1413 = vmul.f32 %v1411, %v1411
        %v1414 = vmul.f32 %v1412, %v1412
        %1415 = vadd.xlane.f32.xlu0 %v1413
        %v1416 = vpop.xlane.xlu0 %1415
        %1417 = vadd.xlane.f32.xlu0 %v1414
        %v1418 = vpop.xlane.xlu0 %1417
        %v1419 = vmul.f32 %v1416, %v590
        %v1420 = vmul.f32 %v1418, %v590
        %v1421 = vadd.f32 %v1419, 1e-06
        %v1422 = vadd.f32 %v1420, 1e-06
        %v1423 = vrsqrt.pop %v1421
        %v1424 = vrsqrt.pop %v1422
        %v1425 = vmul.f32 %v1411, %v1423
        %v1426 = vmul.f32 %v1412, %v1424
        %v1427 = vld [vmem:[%s7] sm:$0x1]
        %v1429 = vlaneseq
        %v1430 = vshrl.u32 %v1429, 7
        %v1431 = vsub.s32 0, %v1430
        %v1432 = vrot.slane %v1427, %v1431
        %v1434 = vmul.f32 %v1425, %v1432
        %v1435 = vmul.f32 %v1426, %v1432
        %v1436 = vpack.c.bf16 %v1435, %v1434
        %v1437 = vld [vmem:[#allocation7] sm:$0xff]
        %v1438 = vld [vmem:[#allocation7 + $0x8] sm:$0xff]
        %v1439 = vld [vmem:[#allocation7 + $0x10] sm:$0xff]
        %v1440 = vld [vmem:[#allocation7 + $0x18] sm:$0xff]
        %v1441 = vld [vmem:[#allocation7 + $0x20] sm:$0xff]
        %v1442 = vld [vmem:[#allocation7 + $0x28] sm:$0xff]
        %v1443 = vld [vmem:[#allocation7 + $0x30] sm:$0xff]
        %v1444 = vld [vmem:[#allocation7 + $0x38] sm:$0xff]
        %v1445 = vld [vmem:[#allocation7 + $0x40] sm:$0xff]
        %v1446 = vld [vmem:[#allocation7 + $0x48] sm:$0xff]
        %v1447 = vld [vmem:[#allocation7 + $0x50] sm:$0xff]
        %v1448 = vld [vmem:[#allocation7 + $0x58] sm:$0xff]
        %v1449 = vld [vmem:[#allocation7 + $0x60] sm:$0xff]
        %v1450 = vld [vmem:[#allocation7 + $0x68] sm:$0xff]
        %v1451 = vld [vmem:[#allocation7 + $0x70] sm:$0xff]
        %v1452 = vld [vmem:[#allocation7 + $0x78] sm:$0xff]
        %v1453 = vld [vmem:[#allocation7 + $0x80] sm:$0xff]
        %v1454 = vld [vmem:[#allocation7 + $0x88] sm:$0xff]
        %v1455 = vld [vmem:[#allocation7 + $0x90] sm:$0xff]
        %v1456 = vld [vmem:[#allocation7 + $0x98] sm:$0xff]
        %v1457 = vld [vmem:[#allocation7 + $0xa0] sm:$0xff]
        %v1458 = vld [vmem:[#allocation7 + $0xa8] sm:$0xff]
        %v1459 = vld [vmem:[#allocation7 + $0xb0] sm:$0xff]
        %v1460 = vld [vmem:[#allocation7 + $0xb8] sm:$0xff]
        %v1461 = vld [vmem:[#allocation7 + $0xc0] sm:$0xff]
        %v1462 = vld [vmem:[#allocation7 + $0xc8] sm:$0xff]
        %v1463 = vld [vmem:[#allocation7 + $0xd0] sm:$0xff]
        %v1464 = vld [vmem:[#allocation7 + $0xd8] sm:$0xff]
        %v1465 = vld [vmem:[#allocation7 + $0xe0] sm:$0xff]
        %v1466 = vld [vmem:[#allocation7 + $0xe8] sm:$0xff]
        %v1467 = vld [vmem:[#allocation7 + $0xf0] sm:$0xff]
        %v1468 = vld [vmem:[#allocation7 + $0xf8] sm:$0xff]
        %v1469 = vld [vmem:[#allocation7 + $0x100] sm:$0xff]
        %v1470 = vld [vmem:[#allocation7 + $0x108] sm:$0xff]
        %v1471 = vld [vmem:[#allocation7 + $0x110] sm:$0xff]
        %v1472 = vld [vmem:[#allocation7 + $0x118] sm:$0xff]
        %v1473 = vld [vmem:[#allocation7 + $0x120] sm:$0xff]
        %v1474 = vld [vmem:[#allocation7 + $0x128] sm:$0xff]
        %v1475 = vld [vmem:[#allocation7 + $0x130] sm:$0xff]
        %v1476 = vld [vmem:[#allocation7 + $0x138] sm:$0xff]
        %v1477 = vld [vmem:[#allocation7 + $0x140] sm:$0xff]
        %v1478 = vld [vmem:[#allocation7 + $0x148] sm:$0xff]
        %v1479 = vld [vmem:[#allocation7 + $0x150] sm:$0xff]
        %v1480 = vld [vmem:[#allocation7 + $0x158] sm:$0xff]
        %v1481 = vld [vmem:[#allocation7 + $0x160] sm:$0xff]
        %v1482 = vld [vmem:[#allocation7 + $0x168] sm:$0xff]
        %v1483 = vld [vmem:[#allocation7 + $0x170] sm:$0xff]
        %v1484 = vld [vmem:[#allocation7 + $0x178] sm:$0xff]
        %v1485 = vld [vmem:[#allocation7 + $0x180] sm:$0xff]
        %v1486 = vld [vmem:[#allocation7 + $0x188] sm:$0xff]
        %v1487 = vld [vmem:[#allocation7 + $0x190] sm:$0xff]
        %v1488 = vld [vmem:[#allocation7 + $0x198] sm:$0xff]
        %v1489 = vld [vmem:[#allocation7 + $0x1a0] sm:$0xff]
        %v1490 = vld [vmem:[#allocation7 + $0x1a8] sm:$0xff]
        %v1491 = vld [vmem:[#allocation7 + $0x1b0] sm:$0xff]
        %v1492 = vld [vmem:[#allocation7 + $0x1b8] sm:$0xff]
        %v1493 = vld [vmem:[#allocation7 + $0x1c0] sm:$0xff]
        %v1494 = vld [vmem:[#allocation7 + $0x1c8] sm:$0xff]
        %v1495 = vld [vmem:[#allocation7 + $0x1d0] sm:$0xff]
        %v1496 = vld [vmem:[#allocation7 + $0x1d8] sm:$0xff]
        %v1497 = vld [vmem:[#allocation7 + $0x1e0] sm:$0xff]
        %v1498 = vld [vmem:[#allocation7 + $0x1e8] sm:$0xff]
        %v1499 = vld [vmem:[#allocation7 + $0x1f0] sm:$0xff]
        %v1500 = vld [vmem:[#allocation7 + $0x1f8] sm:$0xff]
        %v1501 = vpack.c.bf16 %v1441, %v1437
        %v1502 = vpack.c.bf16 %v1442, %v1438
        %v1503 = vpack.c.bf16 %v1443, %v1439
        %v1504 = vpack.c.bf16 %v1444, %v1440
        %v1505 = vpack.c.bf16 %v1449, %v1445
        %v1506 = vpack.c.bf16 %v1450, %v1446
        %v1507 = vpack.c.bf16 %v1451, %v1447
        %v1508 = vpack.c.bf16 %v1452, %v1448
        %v1509 = vpack.c.bf16 %v1457, %v1453
        %v1510 = vpack.c.bf16 %v1458, %v1454
        %v1511 = vpack.c.bf16 %v1459, %v1455
        %v1512 = vpack.c.bf16 %v1460, %v1456
        %v1513 = vpack.c.bf16 %v1465, %v1461
        %v1514 = vpack.c.bf16 %v1466, %v1462
        %v1515 = vpack.c.bf16 %v1467, %v1463
        %v1516 = vpack.c.bf16 %v1468, %v1464
        %v1517 = vpack.c.bf16 %v1473, %v1469
        %v1518 = vpack.c.bf16 %v1474, %v1470
        %v1519 = vpack.c.bf16 %v1475, %v1471
        %v1520 = vpack.c.bf16 %v1476, %v1472
        %v1521 = vpack.c.bf16 %v1481, %v1477
        %v1522 = vpack.c.bf16 %v1482, %v1478
        %v1523 = vpack.c.bf16 %v1483, %v1479
        %v1524 = vpack.c.bf16 %v1484, %v1480
        %v1525 = vpack.c.bf16 %v1489, %v1485
        %v1526 = vpack.c.bf16 %v1490, %v1486
        %v1527 = vpack.c.bf16 %v1491, %v1487
        %v1528 = vpack.c.bf16 %v1492, %v1488
        %v1529 = vpack.c.bf16 %v1497, %v1493
        %v1530 = vpack.c.bf16 %v1498, %v1494
        %v1531 = vpack.c.bf16 %v1499, %v1495
        %v1532 = vpack.c.bf16 %v1500, %v1496
        %v1533 = vld [vmem:[%s9] sm:$0xf]
        %v1535 = vlaneseq
        %v1536 = vshrl.u32 %v1535, 7
        %v1537 = vsub.s32 0, %v1536
        %v1538 = vrot.slane %v1533, %v1537
        %v1539 = vlaneseq
        %v1540 = vshrl.u32 %v1539, 7
        %v1541 = vsub.s32 1, %v1540
        %v1542 = vrot.slane %v1533, %v1541
        %v1543 = vlaneseq
        %v1544 = vshrl.u32 %v1543, 7
        %v1545 = vsub.s32 2, %v1544
        %v1546 = vrot.slane %v1533, %v1545
        %v1547 = vlaneseq
        %v1548 = vshrl.u32 %v1547, 7
        %v1549 = vsub.s32 3, %v1548
        %v1550 = vrot.slane %v1533, %v1549
        %1555 = vmatprep.subr.bf16.mxu0 %v1502
        %1556 = vmatpush1.bf16.msra.mxu0 %v1501
        %1557 = vmatprep.subr.bf16.mxu0 %v1506
        %1558 = vmatpush1.bf16.msra.mxu0 %v1505
        %1559 = vmatprep.subr.bf16.mxu0 %v1510
        %1560 = vmatpush1.bf16.msra.mxu0 %v1509
        %1561 = vmatprep.subr.bf16.mxu0 %v1514
        %1562 = vmatpush1.bf16.msra.mxu0 %v1513
        %1563 = vmatprep.subr.bf16.mxu0 %v1518
        %1564 = vmatpush1.bf16.msra.mxu0 %v1517
        %1565 = vmatprep.subr.bf16.mxu0 %v1522
        %1566 = vmatpush1.bf16.msra.mxu0 %v1521
        %1567 = vmatprep.subr.bf16.mxu0 %v1526
        %1568 = vmatpush1.bf16.msra.mxu0 %v1525
        %1569 = vmatprep.subr.bf16.mxu0 %v1530
        %1570 = vmatpush1.bf16.msra.mxu0 %v1529
        %1571 = vmatprep.subr.bf16.mxu0 0
        %1572 = vmatpush1.bf16.msra.mxu0 0
        %1573 = vmatprep.subr.bf16.mxu0 0
        %1574 = vmatpush1.bf16.msra.mxu0 0
        %1575 = vmatprep.subr.bf16.mxu0 0
        %1576 = vmatpush1.bf16.msra.mxu0 0
        %1577 = vmatprep.subr.bf16.mxu0 0
        %1578 = vmatpush1.bf16.msra.mxu0 0
        %1579 = vmatprep.subr.bf16.mxu0 0
        %1580 = vmatpush1.bf16.msra.mxu0 0
        %1581 = vmatprep.subr.bf16.mxu0 0
        %1582 = vmatpush1.bf16.msra.mxu0 0
        %1583 = vmatprep.subr.bf16.mxu0 0
        %1584 = vmatpush1.bf16.msra.mxu0 0
        %1585 = vmatprep.subr.bf16.mxu0 0
        %1586 = vmatpush1.bf16.msra.mxu0 0
        %1587 = vmatprep.mubr.bf16.mxu0 0
        %1588 = vmatmul.mubr.bf16.gmra.mrb[0].mxu0 %v1436
        %v1589 = vpop.f32.mrb[0].mxu0
        %v1590 = vadd.f32 %v1538, %v1589
        %v1591 = vpop.f32.mrb[0].mxu0
        %v1592 = vadd.f32 %v1542, %v1591
        %v1593 = vpop.f32.mrb[0].mxu0
        %v1594 = vadd.f32 %v1538, %v1593
        %v1595 = vpop.f32.mrb[0].mxu0
        %v1596 = vadd.f32 %v1542, %v1595
        %1597 = vdwg.mxu0
        %1598 = vmatprep.subr.bf16.mxu0 %v1504
        %1599 = vmatpush1.bf16.msra.mxu0 %v1503
        %1600 = vmatprep.subr.bf16.mxu0 %v1508
        %1601 = vmatpush1.bf16.msra.mxu0 %v1507
        %1602 = vmatprep.subr.bf16.mxu0 %v1512
        %1603 = vmatpush1.bf16.msra.mxu0 %v1511
        %1604 = vmatprep.subr.bf16.mxu0 %v1516
        %1605 = vmatpush1.bf16.msra.mxu0 %v1515
        %1606 = vmatprep.subr.bf16.mxu0 %v1520
        %1607 = vmatpush1.bf16.msra.mxu0 %v1519
        %1608 = vmatprep.subr.bf16.mxu0 %v1524
        %1609 = vmatpush1.bf16.msra.mxu0 %v1523
        %1610 = vmatprep.subr.bf16.mxu0 %v1528
        %1611 = vmatpush1.bf16.msra.mxu0 %v1527
        %1612 = vmatprep.subr.bf16.mxu0 %v1532
        %1613 = vmatpush1.bf16.msra.mxu0 %v1531
        %1614 = vmatprep.subr.bf16.mxu0 0
        %1615 = vmatpush1.bf16.msra.mxu0 0
        %1616 = vmatprep.subr.bf16.mxu0 0
        %1617 = vmatpush1.bf16.msra.mxu0 0
        %1618 = vmatprep.subr.bf16.mxu0 0
        %1619 = vmatpush1.bf16.msra.mxu0 0
        %1620 = vmatprep.subr.bf16.mxu0 0
        %1621 = vmatpush1.bf16.msra.mxu0 0
        %1622 = vmatprep.subr.bf16.mxu0 0
        %1623 = vmatpush1.bf16.msra.mxu0 0
        %1624 = vmatprep.subr.bf16.mxu0 0
        %1625 = vmatpush1.bf16.msra.mxu0 0
        %1626 = vmatprep.subr.bf16.mxu0 0
        %1627 = vmatpush1.bf16.msra.mxu0 0
        %1628 = vmatprep.subr.bf16.mxu0 0
        %1629 = vmatpush1.bf16.msra.mxu0 0
        %1630 = vmatprep.mubr.bf16.mxu0 0
        %1631 = vmatmul.mubr.bf16.gmra.mrb[0].mxu0 %v1436
        %v1632 = vpop.f32.mrb[0].mxu0
        %v1633 = vadd.f32 %v1546, %v1632
        %v1634 = vpop.f32.mrb[0].mxu0
        %v1635 = vadd.f32 %v1550, %v1634
        %v1636 = vpop.f32.mrb[0].mxu0
        %v1637 = vadd.f32 %v1546, %v1636
        %v1638 = vpop.f32.mrb[0].mxu0
        %v1639 = vadd.f32 %v1550, %v1638
        %1640 = vdwg.mxu0
        %v1641 = vxor.u32 %v1590, 2147483648
        %v1642 = vxor.u32 %v1592, 2147483648
        %v1643 = vxor.u32 %v1594, 2147483648
        %v1644 = vxor.u32 %v1596, 2147483648
        %v1645 = vmul.f32 %v1641, 1.442695
        %v1646 = vpow.pop %v1645
        %v1647 = vmul.f32 %v1642, 1.442695
        %v1648 = vpow.pop %v1647
        %v1649 = vmul.f32 %v1643, 1.442695
        %v1650 = vpow.pop %v1649
        %v1651 = vmul.f32 %v1644, 1.442695
        %v1652 = vpow.pop %v1651
        %v1653 = vadd.f32 %v1646, 1.0
        %v1654 = vadd.f32 %v1648, 1.0
        %v1655 = vadd.f32 %v1650, 1.0
        %v1656 = vadd.f32 %v1652, 1.0
        %v1657 = vrcp.pop %v1653
        %v1658 = vmul.f32 1.0, %v1657
        %v1659 = vrcp.pop %v1654
        %v1660 = vmul.f32 1.0, %v1659
        %v1661 = vrcp.pop %v1655
        %v1662 = vmul.f32 1.0, %v1661
        %v1663 = vrcp.pop %v1656
        %v1664 = vmul.f32 1.0, %v1663
        %v1665 = vmul.f32 %v1590, %v1658
        %v1666 = vmul.f32 %v1592, %v1660
        %v1667 = vmul.f32 %v1594, %v1662
        %v1668 = vmul.f32 %v1596, %v1664
        %v1669 = vmul.f32 %v1665, %v1633
        %v1670 = vmul.f32 %v1666, %v1635
        %v1671 = vmul.f32 %v1667, %v1637
        %v1672 = vmul.f32 %v1668, %v1639
        %v1673 = vpack.c.bf16 %v1671, %v1669
        %v1674 = vpack.c.bf16 %v1672, %v1670
        %v1675 = vld [vmem:[#allocation8] sm:$0xff]
        %v1676 = vld [vmem:[#allocation8 + $0x8] sm:$0xff]
        %v1677 = vld [vmem:[#allocation8 + $0x10] sm:$0xff]
        %v1678 = vld [vmem:[#allocation8 + $0x18] sm:$0xff]
        %v1679 = vld [vmem:[#allocation8 + $0x20] sm:$0xff]
        %v1680 = vld [vmem:[#allocation8 + $0x28] sm:$0xff]
        %v1681 = vld [vmem:[#allocation8 + $0x30] sm:$0xff]
        %v1682 = vld [vmem:[#allocation8 + $0x38] sm:$0xff]
        %v1683 = vld [vmem:[#allocation8 + $0x40] sm:$0xff]
        %v1684 = vld [vmem:[#allocation8 + $0x48] sm:$0xff]
        %v1685 = vld [vmem:[#allocation8 + $0x50] sm:$0xff]
        %v1686 = vld [vmem:[#allocation8 + $0x58] sm:$0xff]
        %v1687 = vld [vmem:[#allocation8 + $0x60] sm:$0xff]
        %v1688 = vld [vmem:[#allocation8 + $0x68] sm:$0xff]
        %v1689 = vld [vmem:[#allocation8 + $0x70] sm:$0xff]
        %v1690 = vld [vmem:[#allocation8 + $0x78] sm:$0xff]
        %v1691 = vld [vmem:[#allocation8 + $0x80] sm:$0xff]
        %v1692 = vld [vmem:[#allocation8 + $0x88] sm:$0xff]
        %v1693 = vld [vmem:[#allocation8 + $0x90] sm:$0xff]
        %v1694 = vld [vmem:[#allocation8 + $0x98] sm:$0xff]
        %v1695 = vld [vmem:[#allocation8 + $0xa0] sm:$0xff]
        %v1696 = vld [vmem:[#allocation8 + $0xa8] sm:$0xff]
        %v1697 = vld [vmem:[#allocation8 + $0xb0] sm:$0xff]
        %v1698 = vld [vmem:[#allocation8 + $0xb8] sm:$0xff]
        %v1699 = vld [vmem:[#allocation8 + $0xc0] sm:$0xff]
        %v1700 = vld [vmem:[#allocation8 + $0xc8] sm:$0xff]
        %v1701 = vld [vmem:[#allocation8 + $0xd0] sm:$0xff]
        %v1702 = vld [vmem:[#allocation8 + $0xd8] sm:$0xff]
        %v1703 = vld [vmem:[#allocation8 + $0xe0] sm:$0xff]
        %v1704 = vld [vmem:[#allocation8 + $0xe8] sm:$0xff]
        %v1705 = vld [vmem:[#allocation8 + $0xf0] sm:$0xff]
        %v1706 = vld [vmem:[#allocation8 + $0xf8] sm:$0xff]
        %v1707 = vpack.c.bf16 %v1676, %v1675
        %v1708 = vpack.c.bf16 %v1678, %v1677
        %v1709 = vpack.c.bf16 %v1680, %v1679
        %v1710 = vpack.c.bf16 %v1682, %v1681
        %v1711 = vpack.c.bf16 %v1684, %v1683
        %v1712 = vpack.c.bf16 %v1686, %v1685
        %v1713 = vpack.c.bf16 %v1688, %v1687
        %v1714 = vpack.c.bf16 %v1690, %v1689
        %v1715 = vpack.c.bf16 %v1692, %v1691
        %v1716 = vpack.c.bf16 %v1694, %v1693
        %v1717 = vpack.c.bf16 %v1696, %v1695
        %v1718 = vpack.c.bf16 %v1698, %v1697
        %v1719 = vpack.c.bf16 %v1700, %v1699
        %v1720 = vpack.c.bf16 %v1702, %v1701
        %v1721 = vpack.c.bf16 %v1704, %v1703
        %v1722 = vpack.c.bf16 %v1706, %v1705
        %v1723 = vld [vmem:[%s11] sm:$0x1]
        %v1725 = vlaneseq
        %v1726 = vshrl.u32 %v1725, 7
        %v1727 = vsub.s32 0, %v1726
        %v1728 = vrot.slane %v1723, %v1727
        %1730 = vmatprep.subr.bf16.mxu0 0
        %1731 = vmatpush1.bf16.msra.mxu0 %v1707
        %1732 = vmatprep.subr.bf16.mxu0 0
        %1733 = vmatpush1.bf16.msra.mxu0 %v1708
        %1734 = vmatprep.subr.bf16.mxu0 0
        %1735 = vmatpush1.bf16.msra.mxu0 %v1709
        %1736 = vmatprep.subr.bf16.mxu0 0
        %1737 = vmatpush1.bf16.msra.mxu0 %v1710
        %1738 = vmatprep.subr.bf16.mxu0 0
        %1739 = vmatpush1.bf16.msra.mxu0 %v1711
        %1740 = vmatprep.subr.bf16.mxu0 0
        %1741 = vmatpush1.bf16.msra.mxu0 %v1712
        %1742 = vmatprep.subr.bf16.mxu0 0
        %1743 = vmatpush1.bf16.msra.mxu0 %v1713
        %1744 = vmatprep.subr.bf16.mxu0 0
        %1745 = vmatpush1.bf16.msra.mxu0 %v1714
        %1746 = vmatprep.subr.bf16.mxu0 0
        %1747 = vmatpush1.bf16.msra.mxu0 %v1715
        %1748 = vmatprep.subr.bf16.mxu0 0
        %1749 = vmatpush1.bf16.msra.mxu0 %v1716
        %1750 = vmatprep.subr.bf16.mxu0 0
        %1751 = vmatpush1.bf16.msra.mxu0 %v1717
        %1752 = vmatprep.subr.bf16.mxu0 0
        %1753 = vmatpush1.bf16.msra.mxu0 %v1718
        %1754 = vmatprep.subr.bf16.mxu0 0
        %1755 = vmatpush1.bf16.msra.mxu0 %v1719
        %1756 = vmatprep.subr.bf16.mxu0 0
        %1757 = vmatpush1.bf16.msra.mxu0 %v1720
        %1758 = vmatprep.subr.bf16.mxu0 0
        %1759 = vmatpush1.bf16.msra.mxu0 %v1721
        %1760 = vmatprep.subr.bf16.mxu0 0
        %1761 = vmatpush1.bf16.msra.mxu0 %v1722
        %1762 = vmatprep.mubr.bf16.mxu0 %v1674
        %1763 = vmatmul.mubr.bf16.gmra.mrb[0].mxu0 %v1673
        %v1764 = vpop.f32.mrb[0].mxu0
        %v1765 = vadd.f32 %v1728, %v1764
        %v1766 = vpop.f32.mrb[0].mxu0
        %v1767 = vpop.f32.mrb[0].mxu0
        %v1768 = vadd.f32 %v1728, %v1767
        %v1769 = vpop.f32.mrb[0].mxu0
        %1770 = vdwg.mxu0
        %v1771 = vadd.f32 %v1411, %v1765
        %v1772 = vadd.f32 %v1412, %v1768
        %v1773 = vmul.f32 %v1771, %v1771
        %v1774 = vmul.f32 %v1772, %v1772
        %1775 = vadd.xlane.f32.xlu0 %v1773
        %v1776 = vpop.xlane.xlu0 %1775
        %1777 = vadd.xlane.f32.xlu0 %v1774
        %v1778 = vpop.xlane.xlu0 %1777
        %v1779 = vmul.f32 %v1776, %v590
        %v1780 = vmul.f32 %v1778, %v590
        %v1781 = vadd.f32 %v1779, 1e-06
        %v1782 = vadd.f32 %v1780, 1e-06
        %v1783 = vrsqrt.pop %v1781
        %v1784 = vrsqrt.pop %v1782
        %v1785 = vmul.f32 %v1771, %v1783
        %v1786 = vmul.f32 %v1772, %v1784
        %v1787 = vld [vmem:[%s12] sm:$0x1]
        %v1789 = vlaneseq
        %v1790 = vshrl.u32 %v1789, 7
        %v1791 = vsub.s32 0, %v1790
        %v1792 = vrot.slane %v1787, %v1791
        %v1794 = vmul.f32 %v1785, %v1792
        %v1795 = vmul.f32 %v1786, %v1792
        %v1796 = vpack.c.bf16 %v1795, %v1794
        %v1797 = vld [vmem:[#allocation10] sm:$0xff]
        %v1798 = vld [vmem:[#allocation10 + $0x8] sm:$0xff]
        %v1799 = vld [vmem:[#allocation10 + $0x10] sm:$0xff]
        %v1800 = vld [vmem:[#allocation10 + $0x18] sm:$0xff]
        %v1801 = vld [vmem:[#allocation10 + $0x20] sm:$0xff]
        %v1802 = vld [vmem:[#allocation10 + $0x28] sm:$0xff]
        %v1803 = vld [vmem:[#allocation10 + $0x30] sm:$0xff]
        %v1804 = vld [vmem:[#allocation10 + $0x38] sm:$0xff]
        %v1805 = vld [vmem:[#allocation10 + $0x40] sm:$0xff]
        %v1806 = vld [vmem:[#allocation10 + $0x48] sm:$0xff]
        %v1807 = vld [vmem:[#allocation10 + $0x50] sm:$0xff]
        %v1808 = vld [vmem:[#allocation10 + $0x58] sm:$0xff]
        %v1809 = vld [vmem:[#allocation10 + $0x60] sm:$0xff]
        %v1810 = vld [vmem:[#allocation10 + $0x68] sm:$0xff]
        %v1811 = vld [vmem:[#allocation10 + $0x70] sm:$0xff]
        %v1812 = vld [vmem:[#allocation10 + $0x78] sm:$0xff]
        %v1813 = vld [vmem:[#allocation10 + $0x80] sm:$0xff]
        %v1814 = vld [vmem:[#allocation10 + $0x88] sm:$0xff]
        %v1815 = vld [vmem:[#allocation10 + $0x90] sm:$0xff]
        %v1816 = vld [vmem:[#allocation10 + $0x98] sm:$0xff]
        %v1817 = vld [vmem:[#allocation10 + $0xa0] sm:$0xff]
        %v1818 = vld [vmem:[#allocation10 + $0xa8] sm:$0xff]
        %v1819 = vld [vmem:[#allocation10 + $0xb0] sm:$0xff]
        %v1820 = vld [vmem:[#allocation10 + $0xb8] sm:$0xff]
        %v1821 = vld [vmem:[#allocation10 + $0xc0] sm:$0xff]
        %v1822 = vld [vmem:[#allocation10 + $0xc8] sm:$0xff]
        %v1823 = vld [vmem:[#allocation10 + $0xd0] sm:$0xff]
        %v1824 = vld [vmem:[#allocation10 + $0xd8] sm:$0xff]
        %v1825 = vld [vmem:[#allocation10 + $0xe0] sm:$0xff]
        %v1826 = vld [vmem:[#allocation10 + $0xe8] sm:$0xff]
        %v1827 = vld [vmem:[#allocation10 + $0xf0] sm:$0xff]
        %v1828 = vld [vmem:[#allocation10 + $0xf8] sm:$0xff]
        %v1829 = vpack.c.bf16 %v1799, %v1797
        %v1830 = vpack.c.bf16 %v1800, %v1798
        %v1831 = vpack.c.bf16 %v1803, %v1801
        %v1832 = vpack.c.bf16 %v1804, %v1802
        %v1833 = vpack.c.bf16 %v1807, %v1805
        %v1834 = vpack.c.bf16 %v1808, %v1806
        %v1835 = vpack.c.bf16 %v1811, %v1809
        %v1836 = vpack.c.bf16 %v1812, %v1810
        %v1837 = vpack.c.bf16 %v1815, %v1813
        %v1838 = vpack.c.bf16 %v1816, %v1814
        %v1839 = vpack.c.bf16 %v1819, %v1817
        %v1840 = vpack.c.bf16 %v1820, %v1818
        %v1841 = vpack.c.bf16 %v1823, %v1821
        %v1842 = vpack.c.bf16 %v1824, %v1822
        %v1843 = vpack.c.bf16 %v1827, %v1825
        %v1844 = vpack.c.bf16 %v1828, %v1826
        %v1845 = vld [vmem:[%s14] sm:$0x3]
        %v1847 = vlaneseq
        %v1848 = vshrl.u32 %v1847, 7
        %v1849 = vsub.s32 0, %v1848
        %v1850 = vrot.slane %v1845, %v1849
        %v1851 = vlaneseq
        %v1852 = vshrl.u32 %v1851, 7
        %v1853 = vsub.s32 1, %v1852
        %v1854 = vrot.slane %v1845, %v1853
        %1857 = vmatprep.subr.bf16.mxu0 %v1830
        %1858 = vmatpush1.bf16.msra.mxu0 %v1829
        %1859 = vmatprep.subr.bf16.mxu0 %v1832
        %1860 = vmatpush1.bf16.msra.mxu0 %v1831
        %1861 = vmatprep.subr.bf16.mxu0 %v1834
        %1862 = vmatpush1.bf16.msra.mxu0 %v1833
        %1863 = vmatprep.subr.bf16.mxu0 %v1836
        %1864 = vmatpush1.bf16.msra.mxu0 %v1835
        %1865 = vmatprep.subr.bf16.mxu0 %v1838
        %1866 = vmatpush1.bf16.msra.mxu0 %v1837
        %1867 = vmatprep.subr.bf16.mxu0 %v1840
        %1868 = vmatpush1.bf16.msra.mxu0 %v1839
        %1869 = vmatprep.subr.bf16.mxu0 %v1842
        %1870 = vmatpush1.bf16.msra.mxu0 %v1841
        %1871 = vmatprep.subr.bf16.mxu0 %v1844
        %1872 = vmatpush1.bf16.msra.mxu0 %v1843
        %1873 = vmatprep.subr.bf16.mxu0 0
        %1874 = vmatpush1.bf16.msra.mxu0 0
        %1875 = vmatprep.subr.bf16.mxu0 0
        %1876 = vmatpush1.bf16.msra.mxu0 0
        %1877 = vmatprep.subr.bf16.mxu0 0
        %1878 = vmatpush1.bf16.msra.mxu0 0
        %1879 = vmatprep.subr.bf16.mxu0 0
        %1880 = vmatpush1.bf16.msra.mxu0 0
        %1881 = vmatprep.subr.bf16.mxu0 0
        %1882 = vmatpush1.bf16.msra.mxu0 0
        %1883 = vmatprep.subr.bf16.mxu0 0
        %1884 = vmatpush1.bf16.msra.mxu0 0
        %1885 = vmatprep.subr.bf16.mxu0 0
        %1886 = vmatpush1.bf16.msra.mxu0 0
        %1887 = vmatprep.subr.bf16.mxu0 0
        %1888 = vmatpush1.bf16.msra.mxu0 0
        %1889 = vmatprep.mubr.bf16.mxu0 0
        %1890 = vmatmul.mubr.bf16.gmra.mrb[0].mxu0 %v1796
        %v1891 = vpop.f32.mrb[0].mxu0
        %v1892 = vadd.f32 %v1850, %v1891
        %v1893 = vpop.f32.mrb[0].mxu0
        %v1894 = vadd.f32 %v1854, %v1893
        %v1895 = vpop.f32.mrb[0].mxu0
        %v1896 = vadd.f32 %v1850, %v1895
        %v1897 = vpop.f32.mrb[0].mxu0
        %v1898 = vadd.f32 %v1854, %v1897
        %1899 = vdwg.mxu0
        %1900 = vst [vmem:[%s571] sm:$0xff] %v1892
        %1901 = vst [vmem:[%s571 + $0x8] sm:$0xff] %v1894
        %1902 = vst [vmem:[%s571 + $0x10] sm:$0xff] %v1896
        %1903 = vst [vmem:[%s571 + $0x18] sm:$0xff] %v1898
        %s1904 = sand.u32 %s365, 1
        %s1905 = scalar_lea.sflag [#allocation4], %s1904
        %s1906 = sand.u32 %s365, 1
        %s1907 = smul.addr %s1906, 32
        %s1908 = scalar_lea.vmem [#allocation11], %s1907
        // Predicated region
        $region101: #{_text_decoder_jit.1} parent=79 // pred_check
          %p1909 = pneg %p375
        $region102: #{_text_decoder_jit.1} parent=79 // pred_check_branch
          %1911 = sbr.rel (%p1909) target = $region104
        $region103: #{_text_decoder_jit.1} parent=79 // pred_region
          %s1913 = ssub.s32 512, 512
          %1914 = vsyncadd %s1905, %s1913
          %s1915 = smul.addr %s32, 4
          %s1916 = smul.addr %s1915, 128
          %s1917 = scalar_lea.hbm %s15, %s1916
          %s1918 = sshll.u32 %s1908, 4
          %s1919 = int_to_ptr.vmem [resolvable:$true] %s1918
          %1924 = dma.vmem_to_hbm [thread:$0]  %s1919, 512, %s1917, %s1905, 256, 256, 16
        $region104: #{_text_decoder_jit.1} parent=79 // pred_fallthru
          _
      $region80: #{_text_decoder_jit.1} parent=5 // pred_fallthru
        _
      %p1925 = scmp.le.s32.totalorder 2, %s27
      // Predicated region
      $region105: #{_text_decoder_jit.1} parent=5 // pred_check
        %p1926 = pneg %p1925
      $region106: #{_text_decoder_jit.1} parent=5 // pred_check_branch
        %1928 = sbr.rel (%p1926) target = $region108
      $region107: #{_text_decoder_jit.1} parent=5 // pred_region
        %s1929 = ssub.s32 %s27, 2
        // Predicated region
        $region109: #{_text_decoder_jit.1} parent=107 // pred_check
          %p1930 = pneg %p381
        $region110: #{_text_decoder_jit.1} parent=107 // pred_check_branch
          %1932 = sbr.rel (%p1930) target = $region112
        $region111: #{_text_decoder_jit.1} parent=107 // pred_region
          %s1933 = sand.u32 %s366, 1
          %s1934 = scalar_lea.sflag [#allocation4], %s1933
          %s1935 = sand.u32 %s366, 1
          %s1936 = smul.addr %s1935, 32
          %s1937 = scalar_lea.vmem [#allocation11], %s1936
          %1938 = dma.done %s1934, 512
        $region112: #{_text_decoder_jit.1} parent=107 // pred_fallthru
          _
      $region108: #{_text_decoder_jit.1} parent=5 // pred_fallthru
        _
    $region6: #{_text_decoder_jit.1} parent=1 // loop_footer
      %s31 = sadd.s32 1, %s27
    $region7: #{_text_decoder_jit.1} parent=1 // loop_footer_branch
      %26 = sbr.rel target = $region3
    $region8: #{_text_decoder_jit.1} parent=1 // loop_exit
      _
    %1939 = vsyncpa [#allocation3], 1
    %s1940 = scalar_lea.sflag [#allocation3], 1
    %1941 = vsyncpa %s1940, 1
    %1942 = vsyncpa [#allocation6], 1
    %1943 = vsyncpa [#allocation9], 1
    %1944 = vsyncpa [#allocation4], 1
    %s1945 = scalar_lea.sflag [#allocation4], 1
    %1946 = vsyncpa %s1945, 1

</llo_original>
